<compile_context>
chip_gen: v6e
topology: v6e:2x2x1
jax: 0.10.0
libtpu: 0.0.40
codegen_flags: <defaults>
</compile_context>

<pallas_src>
import math

import jax
import jax.numpy as jnp
from jax.experimental import pallas as pl
from jax.experimental.pallas import tpu as pltpu


LANE = 128      # TPU lane width
B_TILE = 128    # batch rows per tile: fills the MXU M dimension on all gens
TK = 512        # reduction tile over the flattened image feature axis


def _round_up(x, m):
    return ((x + m - 1) // m) * m


def flair_multilayer_kernel(img_ref, bb_w_ref, proj_w_ref, concepts_t_ref,
                            cls_w_t_ref, cls_b_ref, sim_ref, acc_ref):
    # Grid = (K reduction [outer], batch tiles [inner]).
    # img_ref:        (B_TILE, TK)           f32 or bf16 image tile (streamed)
    # bb_w_ref:       (TK, F)                bf16, streamed ONCE over the call
    # proj_w_ref:     (F, D)                 bf16, resident
    # concepts_t_ref: (D, Ncpt)              bf16, resident (embed_concepts.T)
    # cls_w_t_ref:    (Ncpt, K_pad)          bf16, resident (classifier W.T, 0-padded)
    # cls_b_ref:      (1, K_pad)             f32,  resident (classifier bias, 0-padded)
    # sim_ref:        (B_TILE, K_pad)        f32 output tile (lane-dense)
    # acc_ref:        (n_btiles, B_TILE, F)  f32 accumulator, one slot per batch tile
    k = pl.program_id(0)
    i = pl.program_id(1)
    acc = acc_ref.at[i]

    @pl.when(k == 0)
    def _():
        acc[...] = jnp.zeros(acc_ref.shape[1:], acc_ref.dtype)

    # --- streamed synthetic vision backbone (stand-in for ResNet50 trunk) ---
    # bf16 operands, f32 MXU accumulation.
    acc[...] += jnp.dot(img_ref[...].astype(jnp.bfloat16), bb_w_ref[...],
                        preferred_element_type=jnp.float32)

    # --- epilogue on the last reduction step, per batch tile -----------------
    @pl.when(k == pl.num_programs(0) - 1)
    def _():
        feat = jnp.maximum(acc[...], 0.0)                              # ReLU (f32)

        # FLAIR projection head: Linear (no bias) + L2 normalize (norm in f32).
        embed = jnp.dot(feat.astype(jnp.bfloat16), proj_w_ref[...],
                        preferred_element_type=jnp.float32)
        inv_norm = jax.lax.rsqrt(
            jnp.sum(embed * embed, axis=-1, keepdims=True) + 1e-12)
        embed = embed * inv_norm                                       # embed_images

        # concept similarity: embed_images @ embed_concepts.T
        concept_sim = jnp.dot(embed.astype(jnp.bfloat16), concepts_t_ref[...],
                              preferred_element_type=jnp.float32)

        # concept classifier: nn.Linear(n_concepts, n_classes), lane-padded.
        sim = jnp.dot(concept_sim.astype(jnp.bfloat16), cls_w_t_ref[...],
                      preferred_element_type=jnp.float32) + cls_b_ref[...]
        sim_ref[...] = sim.astype(sim_ref.dtype)


def prepare_flair_params(bb_w, proj_w, concepts, cls_w, cls_b, *, tk=TK):
    """One-time preprocessing of the frozen weights (hoisted out of the hot
    path): transposes, zero padding to lane/tile-friendly shapes, bf16 casts."""
    chw, f_dim = bb_w.shape
    n_classes = cls_w.shape[0]
    chw_pad = _round_up(chw, tk)
    k_pad = _round_up(max(n_classes, LANE), LANE)

    bb_w_p = jnp.pad(bb_w.astype(jnp.bfloat16), ((0, chw_pad - chw), (0, 0)))
    concepts_t = concepts.T.astype(jnp.bfloat16)                       # (D, Ncpt)
    cls_w_t = jnp.pad(cls_w.T.astype(jnp.bfloat16),
                      ((0, 0), (0, k_pad - n_classes)))                # (Ncpt, K_pad)
    cls_b2d = jnp.pad(cls_b.astype(jnp.float32).reshape(1, -1),
                      ((0, 0), (0, k_pad - n_classes)))                # (1, K_pad)
    return {
        "bb_w": bb_w_p,
        "proj_w": proj_w.astype(jnp.bfloat16),
        "concepts_t": concepts_t,
        "cls_w_t": cls_w_t,
        "cls_b": cls_b2d,
        "n_classes": n_classes,
        "chw": chw,
        "tk": tk,
    }


def flair_multilayer_forward(image, params):
    """image: (B, C, H, W) float32.  Returns sim: (B, n_classes) float32."""
    bb_w = params["bb_w"]
    proj_w = params["proj_w"]
    concepts_t = params["concepts_t"]
    cls_w_t = params["cls_w_t"]
    cls_b2d = params["cls_b"]
    n_classes = params["n_classes"]
    chw = params["chw"]
    tk = params["tk"]

    B = image.shape[0]
    chw_pad, f_dim = bb_w.shape
    d = proj_w.shape[1]
    ncpt = concepts_t.shape[1]
    k_pad = cls_w_t.shape[1]

    assert math.prod(image.shape[1:]) == chw, "image shape mismatch vs backbone weight"

    b_pad = _round_up(max(B, B_TILE), B_TILE)
    nb = b_pad // B_TILE
    nk = chw_pad // tk

    # Padding policy: only materialize a padded copy when it is needed.  The
    # kernel casts each streamed tile to bf16 itself, so an unpadded f32 image
    # can be streamed directly with no wrapper pre-pass.
    x = image.reshape(B, chw)
    if chw_pad != chw:
        # Padding is required anyway -> fold the bf16 cast into the same pass.
        x = jnp.pad(x.astype(jnp.bfloat16),
                    ((0, b_pad - B), (0, chw_pad - chw)))
    elif b_pad != B:
        x = jnp.pad(x, ((0, b_pad - B), (0, 0)))

    # Derived VMEM budget: double-buffered streams + (double-buffered) residents
    # + output + accumulator, with 2x headroom, clamped to stay within every
    # generation's physical VMEM (v7x: 64 MiB per TensorCore).
    streamed = 2 * (B_TILE * tk * x.dtype.itemsize) + 2 * (tk * f_dim * 2)
    resident = 2 * ((f_dim * d + d * ncpt + ncpt * k_pad) * 2 + k_pad * 4)
    out_blk = 2 * (B_TILE * k_pad * 4)
    acc_bytes = nb * B_TILE * f_dim * 4
    vmem_limit = int(min(max(2 * (streamed + resident + out_blk + acc_bytes),
                             16 * 1024 * 1024), 64 * 1024 * 1024))

    # Grid: K reduction OUTER (the bb_w block index changes only once per full
    # batch sweep, so bb_w is streamed from HBM exactly once), batch INNER.
    # Both axes are declared "arbitrary": the batch axis is logically
    # independent, but sharding it across TensorCores would make each core
    # re-stream its own copy of bb_w (the HBM-bound operand) — for multi-core
    # chips the right parallel split is over F column panels (not needed at
    # this F).  Resident operands could additionally use
    # pipeline_mode=pl.Buffered(1) to drop their second buffer on VMEM-tight
    # parts; they are tiny here so it is omitted.
    grid = (nk, nb)

    sim_padded = pl.pallas_call(
        flair_multilayer_kernel,
        out_shape=jax.ShapeDtypeStruct((b_pad, k_pad), jnp.float32),
        grid_spec=pltpu.PrefetchScalarGridSpec(
            num_scalar_prefetch=0,
            grid=grid,
            in_specs=[
                # streamed operands
                pl.BlockSpec((B_TILE, tk), lambda k, i: (i, k)),
                pl.BlockSpec((tk, f_dim), lambda k, i: (k, 0)),
                # small frozen operands: resident (constant block index)
                pl.BlockSpec((f_dim, d), lambda k, i: (0, 0)),
                pl.BlockSpec((d, ncpt), lambda k, i: (0, 0)),
                pl.BlockSpec((ncpt, k_pad), lambda k, i: (0, 0)),
                pl.BlockSpec((1, k_pad), lambda k, i: (0, 0)),
            ],
            out_specs=pl.BlockSpec((B_TILE, k_pad), lambda k, i: (i, 0)),
            scratch_shapes=[pltpu.VMEM((nb, B_TILE, f_dim), jnp.float32)],
        ),
        compiler_params=pltpu.CompilerParams(
            dimension_semantics=("arbitrary", "arbitrary"),
            vmem_limit_bytes=vmem_limit,
        ),
    )(x, bb_w, proj_w, concepts_t, cls_w_t, cls_b2d)

    return sim_padded[:B, :n_classes]


def reference_forward(image, bb_w, proj_w, concepts, cls_w, cls_b):
    """Pure-f32 JAX reference of the module's forward."""
    B = image.shape[0]
    x = image.reshape(B, -1)
    feat = jnp.maximum(x @ bb_w, 0.0)
    embed = feat @ proj_w
    embed = embed * jax.lax.rsqrt(
        jnp.sum(embed * embed, axis=-1, keepdims=True) + 1e-12)
    concept_sim = embed @ concepts.T
    return concept_sim @ cls_w.T + cls_b


def reference_forward_matched(image, bb_w, proj_w, concepts, cls_w, cls_b):
    """Precision-matched reference: bf16 matmul operands, f32 accumulation,
    f32 L2-norm — mirroring the kernel's mixed precision."""
    def mm(a, b):
        return jnp.dot(a.astype(jnp.bfloat16), b.astype(jnp.bfloat16),
                       preferred_element_type=jnp.float32)
    B = image.shape[0]
    x = image.reshape(B, -1)
    feat = jnp.maximum(mm(x, bb_w), 0.0)
    embed = mm(feat, proj_w)
    embed = embed * jax.lax.rsqrt(
        jnp.sum(embed * embed, axis=-1, keepdims=True) + 1e-12)
    concept_sim = mm(embed, concepts.T)
    return mm(concept_sim, cls_w.T) + cls_b


if __name__ == "__main__":
    # Small shapes consistent with the module's forward:
    #   image (B, 3, H, W); backbone feature width F (stand-in for 2048);
    #   latent_dim D (stand-in for FLAIR's 512); Ncpt concepts; K classes.
    B, C, H, W = 2, 3, 16, 16
    F_DIM, D, NCPT, K = 256, 128, 128, 5

    key = jax.random.PRNGKey(0)
    k_img, k_bb, k_proj, k_cpt, k_cw, k_cb = jax.random.split(key, 6)

    image = jax.random.normal(k_img, (B, C, H, W), dtype=jnp.float32)
    bb_w = jax.random.normal(k_bb, (C * H * W, F_DIM), dtype=jnp.float32) * 0.02
    proj_w = jax.random.normal(k_proj, (F_DIM, D), dtype=jnp.float32) * 0.02
    # embed_concepts: precomputed, L2-normalized text embeddings (frozen buffer)
    concepts = jax.random.normal(k_cpt, (NCPT, D), dtype=jnp.float32)
    concepts = concepts / jnp.linalg.norm(concepts, axis=-1, keepdims=True)
    cls_w = jax.random.normal(k_cw, (K, NCPT), dtype=jnp.float32) * 0.05
    cls_b = jax.random.normal(k_cb, (K,), dtype=jnp.float32) * 0.01

    params = prepare_flair_params(bb_w, proj_w, concepts, cls_w, cls_b)
    sim = flair_multilayer_forward(image, params)
    sim = jax.block_until_ready(sim)
    assert sim.shape == (B, K), sim.shape

    ref_matched = reference_forward_matched(image, bb_w, proj_w, concepts, cls_w, cls_b)
    ref_f32 = reference_forward(image, bb_w, proj_w, concepts, cls_w, cls_b)

    err_matched = float(jnp.max(jnp.abs(sim - ref_matched)))
    err_f32 = float(jnp.max(jnp.abs(sim - ref_f32)))
    # Matched-precision check (tight); full-f32 check (loose: bf16 operands).
    assert jnp.allclose(sim, ref_matched, atol=5e-3, rtol=5e-3), err_matched
    assert jnp.allclose(sim, ref_f32, atol=8e-2, rtol=8e-2), err_f32

    print("KERNEL_OK")
</pallas_src>

<mosaic_0001>
module attributes {stable_mosaic.version = 11 : i64} {
  func.func @flair_multilayer_kernel(%arg0: i32, %arg1: i32, %arg2: memref<128x512xbf16, #tpu.memory_space<vmem>>, %arg3: memref<512x256xbf16, #tpu.memory_space<vmem>>, %arg4: memref<256x128xbf16, #tpu.memory_space<vmem>>, %arg5: memref<128x128xbf16, #tpu.memory_space<vmem>>, %arg6: memref<128x128xbf16, #tpu.memory_space<vmem>>, %arg7: memref<1x128xf32, #tpu.memory_space<vmem>>, %arg8: memref<128x128xf32, #tpu.memory_space<vmem>>, %arg9: memref<1x128x256xf32, #tpu.memory_space<vmem>>) attributes {dimension_semantics = [#tpu.dimension_semantics<arbitrary>, #tpu.dimension_semantics<arbitrary>], iteration_bounds = array<i64: 2, 1>, scalar_prefetch = 0 : i64, scratch_operands = 1 : i64, tpu.core_type = #tpu.core_type<tc>, window_params = [{transform_indices = @transform_0, window_bounds = array<i64: 128, 512>}, {transform_indices = @transform_1, window_bounds = array<i64: 512, 256>}, {pipeline_mode = #tpu.pipeline_mode<synchronous>, transform_indices = @transform_2, window_bounds = array<i64: 256, 128>}, {pipeline_mode = #tpu.pipeline_mode<synchronous>, transform_indices = @transform_3, window_bounds = array<i64: 128, 128>}, {pipeline_mode = #tpu.pipeline_mode<synchronous>, transform_indices = @transform_4, window_bounds = array<i64: 128, 128>}, {pipeline_mode = #tpu.pipeline_mode<synchronous>, transform_indices = @transform_5, window_bounds = array<i64: 1, 128>}, {transform_indices = @transform_6, window_bounds = array<i64: 128, 128>}]} {
    %c0_i32 = arith.constant 0 : i32
    %0 = arith.cmpi eq, %arg0, %c0_i32 : i32
    %1 = arith.extui %0 : i1 to i32
    %c0_i32_0 = arith.constant 0 : i32
    %2 = arith.cmpi ne, %1, %c0_i32_0 : i32
    scf.if %2 {
      %cst_9 = arith.constant 0.000000e+00 : f32
      %17 = vector.broadcast %cst_9 : f32 to vector<128x256xf32>
      %18 = arith.index_cast %arg1 : i32 to index
      %c0_10 = arith.constant 0 : index
      %c0_11 = arith.constant 0 : index
      %19 = vector.load %arg9[%18, %c0_10, %c0_11] : memref<1x128x256xf32, #tpu.memory_space<vmem>>, vector<1x128x256xf32>
      %20 = vector.shape_cast %19 : vector<1x128x256xf32> to vector<128x256xf32>
      %21 = vector.shape_cast %17 : vector<128x256xf32> to vector<1x128x256xf32>
      tpu.vector_store %arg9[%18, %c0_10, %c0_11], %21 {strides = array<i32>} : memref<1x128x256xf32, #tpu.memory_space<vmem>>, vector<1x128x256xf32>,
    } else {
    }
    %3 = arith.index_cast %arg1 : i32 to index
    %c0 = arith.constant 0 : index
    %c0_1 = arith.constant 0 : index
    %4 = vector.load %arg9[%3, %c0, %c0_1] : memref<1x128x256xf32, #tpu.memory_space<vmem>>, vector<1x128x256xf32>
    %5 = vector.shape_cast %4 : vector<1x128x256xf32> to vector<128x256xf32>
    %c0_2 = arith.constant 0 : index
    %c0_3 = arith.constant 0 : index
    %6 = vector.load %arg2[%c0_2, %c0_3] : memref<128x512xbf16, #tpu.memory_space<vmem>>, vector<128x512xbf16>
    %c0_4 = arith.constant 0 : index
    %c0_5 = arith.constant 0 : index
    %7 = vector.load %arg3[%c0_4, %c0_5] : memref<512x256xbf16, #tpu.memory_space<vmem>>, vector<512x256xbf16>
    %cst = arith.constant dense<0.000000e+00> : vector<128x256xf32>
    %8 = tpu.matmul %6, %7, %cst {dimension_numbers = #tpu.dot_dimension_numbers<[1], [0], [0], [1], [0, 0, 1, 1], [], []>} : vector<128x512xbf16>, vector<512x256xbf16>, vector<128x256xf32> -> vector<128x256xf32>
    %9 = arith.addf %5, %8 : vector<128x256xf32>
    %10 = arith.index_cast %arg1 : i32 to index
    %c0_6 = arith.constant 0 : index
    %c0_7 = arith.constant 0 : index
    %11 = vector.load %arg9[%10, %c0_6, %c0_7] : memref<1x128x256xf32, #tpu.memory_space<vmem>>, vector<1x128x256xf32>
    %12 = vector.shape_cast %11 : vector<1x128x256xf32> to vector<128x256xf32>
    %13 = vector.shape_cast %9 : vector<128x256xf32> to vector<1x128x256xf32>
    tpu.vector_store %arg9[%10, %c0_6, %c0_7], %13 {strides = array<i32>} : memref<1x128x256xf32, #tpu.memory_space<vmem>>, vector<1x128x256xf32>,
    %c1_i32 = arith.constant 1 : i32
    %14 = arith.cmpi eq, %arg0, %c1_i32 : i32
    %15 = arith.extui %14 : i1 to i32
    %c0_i32_8 = arith.constant 0 : i32
    %16 = arith.cmpi ne, %15, %c0_i32_8 : i32
    scf.if %16 {
      %17 = arith.index_cast %arg1 : i32 to index
      %c0_9 = arith.constant 0 : index
      %c0_10 = arith.constant 0 : index
      %18 = vector.load %arg9[%17, %c0_9, %c0_10] : memref<1x128x256xf32, #tpu.memory_space<vmem>>, vector<1x128x256xf32>
      %19 = vector.shape_cast %18 : vector<1x128x256xf32> to vector<128x256xf32>
      %cst_11 = arith.constant 0.000000e+00 : f32
      %20 = vector.broadcast %cst_11 : f32 to vector<128x256xf32>
      %21 = arith.maximumf %19, %20 : vector<128x256xf32>
      %22 = arith.truncf %21 : vector<128x256xf32> to vector<128x256xbf16>
      %c0_12 = arith.constant 0 : index
      %c0_13 = arith.constant 0 : index
      %23 = vector.load %arg4[%c0_12, %c0_13] : memref<256x128xbf16, #tpu.memory_space<vmem>>, vector<256x128xbf16>
      %cst_14 = arith.constant dense<0.000000e+00> : vector<128x128xf32>
      %24 = tpu.matmul %22, %23, %cst_14 {dimension_numbers = #tpu.dot_dimension_numbers<[1], [0], [0], [1], [0, 0, 1, 1], [], []>} : vector<128x256xbf16>, vector<256x128xbf16>, vector<128x128xf32> -> vector<128x128xf32>
      %25 = arith.mulf %24, %24 : vector<128x128xf32>
      %cst_15 = arith.constant dense<0.000000e+00> : vector<128xf32>
      %26 = vector.multi_reduction <add>, %25, %cst_15 [1] : vector<128x128xf32> to vector<128xf32>
      %27 = vector.shape_cast %26 : vector<128xf32> to vector<128x1xf32>
      %cst_16 = arith.constant 9.99999996E-13 : f32
      %28 = vector.broadcast %cst_16 : f32 to vector<128x1xf32>
      %29 = arith.addf %27, %28 : vector<128x1xf32>
      %30 = math.rsqrt %29 : vector<128x1xf32>
      %31 = vector.broadcast %30 : vector<128x1xf32> to vector<128x128xf32>
      %32 = arith.mulf %24, %31 : vector<128x128xf32>
      %33 = arith.truncf %32 : vector<128x128xf32> to vector<128x128xbf16>
      %c0_17 = arith.constant 0 : index
      %c0_18 = arith.constant 0 : index
      %34 = vector.load %arg5[%c0_17, %c0_18] : memref<128x128xbf16, #tpu.memory_space<vmem>>, vector<128x128xbf16>
      %cst_19 = arith.constant dense<0.000000e+00> : vector<128x128xf32>
      %35 = tpu.matmul %33, %34, %cst_19 {dimension_numbers = #tpu.dot_dimension_numbers<[1], [0], [0], [1], [0, 0, 1, 1], [], []>} : vector<128x128xbf16>, vector<128x128xbf16>, vector<128x128xf32> -> vector<128x128xf32>
      %36 = arith.truncf %35 : vector<128x128xf32> to vector<128x128xbf16>
      %c0_20 = arith.constant 0 : index
      %c0_21 = arith.constant 0 : index
      %37 = vector.load %arg6[%c0_20, %c0_21] : memref<128x128xbf16, #tpu.memory_space<vmem>>, vector<128x128xbf16>
      %cst_22 = arith.constant dense<0.000000e+00> : vector<128x128xf32>
      %38 = tpu.matmul %36, %37, %cst_22 {dimension_numbers = #tpu.dot_dimension_numbers<[1], [0], [0], [1], [0, 0, 1, 1], [], []>} : vector<128x128xbf16>, vector<128x128xbf16>, vector<128x128xf32> -> vector<128x128xf32>
      %c0_23 = arith.constant 0 : index
      %c0_24 = arith.constant 0 : index
      %39 = vector.load %arg7[%c0_23, %c0_24] : memref<1x128xf32, #tpu.memory_space<vmem>>, vector<1x128xf32>
      %40 = vector.broadcast %39 : vector<1x128xf32> to vector<128x128xf32>
      %41 = arith.addf %38, %40 : vector<128x128xf32>
      %c0_25 = arith.constant 0 : index
      %c0_26 = arith.constant 0 : index
      %42 = vector.load %arg8[%c0_25, %c0_26] : memref<128x128xf32, #tpu.memory_space<vmem>>, vector<128x128xf32>
      tpu.vector_store %arg8[%c0_25, %c0_26], %41 {strides = array<i32>} : memref<128x128xf32, #tpu.memory_space<vmem>>, vector<128x128xf32>,
    } else {
    }
    return
  }
  func.func @transform_0(%arg0: i32, %arg1: i32) -> (i32, i32) {
    %c0_i32 = arith.constant 0 : i32
    return %arg1, %arg0 : i32, i32
  }
  func.func @transform_1(%arg0: i32, %arg1: i32) -> (i32, i32) {
    %c0_i32 = arith.constant 0 : i32
    %c0_i32_0 = arith.constant 0 : i32
    return %arg0, %c0_i32 : i32, i32
  }
  func.func @transform_2(%arg0: i32, %arg1: i32) -> (i32, i32) {
    %c0_i32 = arith.constant 0 : i32
    %c0_i32_0 = arith.constant 0 : i32
    %c0_i32_1 = arith.constant 0 : i32
    return %c0_i32, %c0_i32_0 : i32, i32
  }
  func.func @transform_3(%arg0: i32, %arg1: i32) -> (i32, i32) {
    %c0_i32 = arith.constant 0 : i32
    %c0_i32_0 = arith.constant 0 : i32
    %c0_i32_1 = arith.constant 0 : i32
    return %c0_i32, %c0_i32_0 : i32, i32
  }
  func.func @transform_4(%arg0: i32, %arg1: i32) -> (i32, i32) {
    %c0_i32 = arith.constant 0 : i32
    %c0_i32_0 = arith.constant 0 : i32
    %c0_i32_1 = arith.constant 0 : i32
    return %c0_i32, %c0_i32_0 : i32, i32
  }
  func.func @transform_5(%arg0: i32, %arg1: i32) -> (i32, i32) {
    %c0_i32 = arith.constant 0 : i32
    %c0_i32_0 = arith.constant 0 : i32
    %c0_i32_1 = arith.constant 0 : i32
    return %c0_i32, %c0_i32_0 : i32, i32
  }
  func.func @transform_6(%arg0: i32, %arg1: i32) -> (i32, i32) {
    %c0_i32 = arith.constant 0 : i32
    %c0_i32_0 = arith.constant 0 : i32
    return %arg1, %c0_i32 : i32, i32
  }
}

</mosaic_0001>

<llo_original>
// kernel: tpu_custom_call.1
$region0: #{tpu_custom_call.1}
  #allocation0 [shape = 'u32[]', space=smem, size = 0x4, offset = 0x4, fixed_abs, tag = 'smem constant byte address 0x4 - core index']
  #allocation1 [shape = 'u32[144,128]{1,0:T(1,128)}', space=vmem, size = 0x12000, scoped, tag = 'internal scratch']
  #allocation2 [shape = 'f32[1,128,256]{2,1,0:T(8,128)}', space=vmem, size = 0x20000, scoped, tag = 'scratch operand']
  %s0 = inlined_call_operand.hbm [shape: bf16[128,1024], index: 0, kind: input, shape index: {}]
  %s1 = inlined_call_operand.hbm [shape: bf16[1024,256], index: 1, kind: input, shape index: {}]
  %s2 = inlined_call_operand.hbm [shape: bf16[256,128], index: 2, kind: input, shape index: {}]
  %s3 = inlined_call_operand.hbm [shape: bf16[128,128], index: 3, kind: input, shape index: {}]
  %s4 = inlined_call_operand.hbm [shape: bf16[128,128], index: 4, kind: input, shape index: {}]
  %s5 = inlined_call_operand.vmem [shape: f32[1,128], index: 5, kind: input, shape index: {}]
  %s6 = inlined_call_operand.hbm [shape: f32[128,128], index: 6, kind: output, shape index: {}]
  %s7 = sld [smem:[#allocation0]]
  $region85: #{tpu_custom_call.1} parent=0
    _
  %s9 = ssub.s32 1, %s7
  %s10 = scalar_select 0, %s9, %s7
  $region1: #{tpu_custom_call.1} parent=0
    #allocation3 [shape = 'u8[262144]{0}', space=vmem, size = 0x40000, scoped, tag = 'input window, operand 0']
    #allocation4 [shape = 's32[2]{0}', space=sflag, size = 0x8, scoped, tag = 'scoped memory for tpu_custom_call.1']
    #allocation5 [shape = 's32[2]{0}', space=sflag, size = 0x8, scoped, tag = 'scoped memory for tpu_custom_call.1']
    #allocation6 [shape = 'u8[524288]{0}', space=vmem, size = 0x80000, scoped, tag = 'input window, operand 1']
    #allocation7 [shape = 's32[2]{0}', space=sflag, size = 0x8, scoped, tag = 'scoped memory for tpu_custom_call.1']
    #allocation8 [shape = 'u8[65536]{0}', space=vmem, size = 0x10000, scoped, tag = 'input window, operand 2, single buffered']
    #allocation9 [shape = 'u8[32768]{0}', space=vmem, size = 0x8000, scoped, tag = 'input window, operand 3, single buffered']
    #allocation10 [shape = 's32[1]{0}', space=sflag, size = 0x4, scoped, tag = 'scoped memory for tpu_custom_call.1']
    #allocation11 [shape = 'u8[32768]{0}', space=vmem, size = 0x8000, scoped, tag = 'input window, operand 4, single buffered']
    #allocation12 [shape = 'u8[65536]{0}', space=vmem, size = 0x10000, scoped, tag = 'output window, operand 0, single buffered']
    %11 = vsyncpa [#allocation4], 0
    %s12 = scalar_lea.sflag [#allocation4], 1
    %13 = vsyncpa %s12, 0
    %14 = vsyncpa [#allocation7], 0
    %s15 = scalar_lea.sflag [#allocation7], 1
    %16 = vsyncpa %s15, 0
    %17 = vsyncpa [#allocation10], 0
    %18 = vsyncpa [#allocation5], 0
    loop: start=0, step=1, limit=4
    $region2: #{tpu_custom_call.1} parent=1 // loop_pre_header
      _
    $region3: #{tpu_custom_call.1} parent=1 // loop_header
      %s20 = sphi 0, %s24
      %p21 = scmp.ge.s32.totalorder %s20, 4
      %s27 = sphi 0, %s39
      %s28 = sphi 0, %s35
      %s29 = sphi 0, %s27
      %s30 = sphi 0, %s28
      %s31 = sphi 0, %s29
      %s32 = sphi 0, %s30
      %s44 = sphi 0, %s46
      %s47 = sphi 0, %s44
      %s48 = sphi 0, %s47
      %s64 = sphi 0, %s48
      %s70 = sphi 0, %s72
      %s73 = sphi 0, %s70
      %s74 = sphi 0, %s73
      %s90 = sphi 0, %s74
      %s94 = sphi 0, %s94
      %s96 = sphi 0, %s94
      %s97 = sphi 0, %s96
      %s111 = sphi 0, %s97
      %s115 = sphi 0, %s115
      %s117 = sphi 0, %s115
      %s118 = sphi 0, %s117
      %s132 = sphi 0, %s118
      %s136 = sphi 0, %s136
      %s138 = sphi 0, %s136
      %s139 = sphi 0, %s138
      %s153 = sphi 0, %s139
      %s157 = sphi 0, %s157
      %s159 = sphi 0, %s157
      %s160 = sphi 0, %s159
      %s174 = sphi 0, %s160
      %s180 = sphi 0, %s182
      %s183 = sphi 0, %s180
      %s184 = sphi 0, %s183
      %s200 = sphi 0, %s184
    $region4: #{tpu_custom_call.1} parent=1 // loop_header_branch
      %23 = sbr.rel (%p21) target = $region8
    $region5: #{tpu_custom_call.1} parent=1 // loop_body
      %s25 = ssub.s32 %s20, 1
      %s26 = ssub.s32 %s20, 2
      %s33 = sadd.s32 1, %s28
      %p34 = scmp.ge.s32.totalorder %s33, 1
      %s35 = scalar_select %p34, 0, %s33
      %s36 = sadd.s32 1, %s27
      %s37 = scalar_select %p34, %s36, %s27
      %p38 = scmp.ge.s32.totalorder %s37, 2
      %s39 = scalar_select %p38, 0, %s37
      %s40 = ssub.s32 %s28, %s35
      %s41 = ssub.s32 %s27, %s39
      %s42 = sor.u32 %s40, %s41
      %p43 = scmp.eq.s32.totalorder %s42, 0
      %s45 = sadd.s32 %s44, 1
      %s46 = scalar_select %p43, %s44, %s45
      %p49 = pneg %p43
      %p50 = scmp.eq.s32.totalorder %s20, 1
      %p51 = por %p49, %p50
      %p52 = scmp.ne.s32.totalorder %s44, %s47
      %p53 = scmp.eq.s32.totalorder %s20, 0
      %p54 = por %p52, %p53
      %p55 = scmp.ne.s32.totalorder %s44, %s47
      %p56 = scmp.eq.s32.totalorder %s25, 1
      %p57 = por %p55, %p56
      %p58 = scmp.ne.s32.totalorder %s47, %s48
      %p59 = scmp.eq.s32.totalorder %s25, 0
      %p60 = por %p58, %p59
      %p61 = scmp.ne.s32.totalorder %s47, %s48
      %p62 = scmp.eq.s32.totalorder %s26, 1
      %p63 = por %p61, %p62
      %p65 = scmp.ne.s32.totalorder %s48, %s64
      %p66 = scmp.eq.s32.totalorder %s26, 0
      %p67 = por %p65, %p66
      %s68 = ssub.s32 %s27, %s39
      %p69 = scmp.eq.s32.totalorder %s68, 0
      %s71 = sadd.s32 %s70, 1
      %s72 = scalar_select %p69, %s70, %s71
      %p75 = pneg %p69
      %p76 = scmp.eq.s32.totalorder %s20, 1
      %p77 = por %p75, %p76
      %p78 = scmp.ne.s32.totalorder %s70, %s73
      %p79 = scmp.eq.s32.totalorder %s20, 0
      %p80 = por %p78, %p79
      %p81 = scmp.ne.s32.totalorder %s70, %s73
      %p82 = scmp.eq.s32.totalorder %s25, 1
      %p83 = por %p81, %p82
      %p84 = scmp.ne.s32.totalorder %s73, %s74
      %p85 = scmp.eq.s32.totalorder %s25, 0
      %p86 = por %p84, %p85
      %p87 = scmp.ne.s32.totalorder %s73, %s74
      %p88 = scmp.eq.s32.totalorder %s26, 1
      %p89 = por %p87, %p88
      %p91 = scmp.ne.s32.totalorder %s74, %s90
      %p92 = scmp.eq.s32.totalorder %s26, 0
      %p93 = por %p91, %p92
      %s95 = sadd.s32 %s94, 1
      %p98 = scmp.eq.s32.totalorder %s20, 1
      %p99 = scmp.ne.s32.totalorder %s94, %s96
      %p100 = scmp.eq.s32.totalorder %s20, 0
      %p101 = por %p99, %p100
      %p102 = scmp.ne.s32.totalorder %s94, %s96
      %p103 = scmp.eq.s32.totalorder %s25, 1
      %p104 = por %p102, %p103
      %p105 = scmp.ne.s32.totalorder %s96, %s97
      %p106 = scmp.eq.s32.totalorder %s25, 0
      %p107 = por %p105, %p106
      %p108 = scmp.ne.s32.totalorder %s96, %s97
      %p109 = scmp.eq.s32.totalorder %s26, 1
      %p110 = por %p108, %p109
      %p112 = scmp.ne.s32.totalorder %s97, %s111
      %p113 = scmp.eq.s32.totalorder %s26, 0
      %p114 = por %p112, %p113
      %s116 = sadd.s32 %s115, 1
      %p119 = scmp.eq.s32.totalorder %s20, 1
      %p120 = scmp.ne.s32.totalorder %s115, %s117
      %p121 = scmp.eq.s32.totalorder %s20, 0
      %p122 = por %p120, %p121
      %p123 = scmp.ne.s32.totalorder %s115, %s117
      %p124 = scmp.eq.s32.totalorder %s25, 1
      %p125 = por %p123, %p124
      %p126 = scmp.ne.s32.totalorder %s117, %s118
      %p127 = scmp.eq.s32.totalorder %s25, 0
      %p128 = por %p126, %p127
      %p129 = scmp.ne.s32.totalorder %s117, %s118
      %p130 = scmp.eq.s32.totalorder %s26, 1
      %p131 = por %p129, %p130
      %p133 = scmp.ne.s32.totalorder %s118, %s132
      %p134 = scmp.eq.s32.totalorder %s26, 0
      %p135 = por %p133, %p134
      %s137 = sadd.s32 %s136, 1
      %p140 = scmp.eq.s32.totalorder %s20, 1
      %p141 = scmp.ne.s32.totalorder %s136, %s138
      %p142 = scmp.eq.s32.totalorder %s20, 0
      %p143 = por %p141, %p142
      %p144 = scmp.ne.s32.totalorder %s136, %s138
      %p145 = scmp.eq.s32.totalorder %s25, 1
      %p146 = por %p144, %p145
      %p147 = scmp.ne.s32.totalorder %s138, %s139
      %p148 = scmp.eq.s32.totalorder %s25, 0
      %p149 = por %p147, %p148
      %p150 = scmp.ne.s32.totalorder %s138, %s139
      %p151 = scmp.eq.s32.totalorder %s26, 1
      %p152 = por %p150, %p151
      %p154 = scmp.ne.s32.totalorder %s139, %s153
      %p155 = scmp.eq.s32.totalorder %s26, 0
      %p156 = por %p154, %p155
      %s158 = sadd.s32 %s157, 1
      %p161 = scmp.eq.s32.totalorder %s20, 1
      %p162 = scmp.ne.s32.totalorder %s157, %s159
      %p163 = scmp.eq.s32.totalorder %s20, 0
      %p164 = por %p162, %p163
      %p165 = scmp.ne.s32.totalorder %s157, %s159
      %p166 = scmp.eq.s32.totalorder %s25, 1
      %p167 = por %p165, %p166
      %p168 = scmp.ne.s32.totalorder %s159, %s160
      %p169 = scmp.eq.s32.totalorder %s25, 0
      %p170 = por %p168, %p169
      %p171 = scmp.ne.s32.totalorder %s159, %s160
      %p172 = scmp.eq.s32.totalorder %s26, 1
      %p173 = por %p171, %p172
      %p175 = scmp.ne.s32.totalorder %s160, %s174
      %p176 = scmp.eq.s32.totalorder %s26, 0
      %p177 = por %p175, %p176
      %s178 = ssub.s32 %s28, %s35
      %p179 = scmp.eq.s32.totalorder %s178, 0
      %s181 = sadd.s32 %s180, 1
      %s182 = scalar_select %p179, %s180, %s181
      %p185 = pneg %p179
      %p186 = scmp.eq.s32.totalorder %s20, 1
      %p187 = por %p185, %p186
      %p188 = scmp.ne.s32.totalorder %s180, %s183
      %p189 = scmp.eq.s32.totalorder %s20, 0
      %p190 = por %p188, %p189
      %p191 = scmp.ne.s32.totalorder %s180, %s183
      %p192 = scmp.eq.s32.totalorder %s25, 1
      %p193 = por %p191, %p192
      %p194 = scmp.ne.s32.totalorder %s183, %s184
      %p195 = scmp.eq.s32.totalorder %s25, 0
      %p196 = por %p194, %p195
      %p197 = scmp.ne.s32.totalorder %s183, %s184
      %p198 = scmp.eq.s32.totalorder %s26, 1
      %p199 = por %p197, %p198
      %p201 = scmp.ne.s32.totalorder %s184, %s200
      %p202 = scmp.eq.s32.totalorder %s26, 0
      %p203 = por %p201, %p202
      %p204 = scmp.le.s32.totalorder 1, %s20
      %p205 = scmp.lt.s32.totalorder %s20, 3
      %p206 = pnand %p204, %p205
      %p207 = pneg %p206
      // Predicated region
      $region9: #{tpu_custom_call.1} parent=5 // pred_check
        _
      $region10: #{tpu_custom_call.1} parent=5 // pred_check_branch
        %209 = sbr.rel (%p206) target = $region12
      $region11: #{tpu_custom_call.1} parent=5 // pred_region
        %s210 = ssub.s32 %s20, 1
        // Predicated region
        $region13: #{tpu_custom_call.1} parent=11 // pred_check
          %p211 = pneg %p107
        $region14: #{tpu_custom_call.1} parent=11 // pred_check_branch
          %213 = sbr.rel (%p211) target = $region16
        $region15: #{tpu_custom_call.1} parent=11 // pred_region
          %s215 = ssub.s32 2048, 2048
          %216 = vsyncadd [#allocation7], %s215
          %s217 = sshll.u32 [#allocation8], 4
          %s218 = int_to_ptr.vmem [resolvable:$true] %s217
          %223 = dma.hbm_to_vmem [thread:$0]  %s2, 2048, %s218, [#allocation7], 64, 64, 4
        $region16: #{tpu_custom_call.1} parent=11 // pred_fallthru
          _
        // Predicated region
        $region17: #{tpu_custom_call.1} parent=11 // pred_check
          %p224 = pneg %p128
        $region18: #{tpu_custom_call.1} parent=11 // pred_check_branch
          %226 = sbr.rel (%p224) target = $region20
        $region19: #{tpu_custom_call.1} parent=11 // pred_region
          %s228 = ssub.s32 1024, 1024
          %229 = vsyncadd [#allocation10], %s228
          %s230 = sshll.u32 [#allocation9], 4
          %s231 = int_to_ptr.vmem [resolvable:$true] %s230
          %236 = dma.hbm_to_vmem [thread:$0]  %s3, 1024, %s231, [#allocation10], 64, 64, 4
        $region20: #{tpu_custom_call.1} parent=11 // pred_fallthru
          _
        // Predicated region
        $region21: #{tpu_custom_call.1} parent=11 // pred_check
          %p237 = pneg %p149
        $region22: #{tpu_custom_call.1} parent=11 // pred_check_branch
          %239 = sbr.rel (%p237) target = $region24
        $region23: #{tpu_custom_call.1} parent=11 // pred_region
          %s241 = ssub.s32 1024, 1024
          %242 = vsyncadd [#allocation10], %s241
          %s243 = sshll.u32 [#allocation11], 4
          %s244 = int_to_ptr.vmem [resolvable:$true] %s243
          %249 = dma.hbm_to_vmem [thread:$0]  %s4, 1024, %s244, [#allocation10], 64, 64, 4
        $region24: #{tpu_custom_call.1} parent=11 // pred_fallthru
          _
        // Predicated region
        $region25: #{tpu_custom_call.1} parent=11 // pred_check
          %p250 = pneg %p170
        $region26: #{tpu_custom_call.1} parent=11 // pred_check_branch
          %252 = sbr.rel (%p250) target = $region28
        $region27: #{tpu_custom_call.1} parent=11 // pred_region
          _
        $region28: #{tpu_custom_call.1} parent=11 // pred_fallthru
          _
      $region12: #{tpu_custom_call.1} parent=5 // pred_fallthru
        _
      %p253 = scmp.lt.s32.totalorder %s20, 2
      // Predicated region
      $region29: #{tpu_custom_call.1} parent=5 // pred_check
        %p254 = pneg %p253
      $region30: #{tpu_custom_call.1} parent=5 // pred_check_branch
        %256 = sbr.rel (%p254) target = $region32
      $region31: #{tpu_custom_call.1} parent=5 // pred_region
        // Predicated region
        $region33: #{tpu_custom_call.1} parent=31 // pred_check
          %p257 = pneg %p54
        $region34: #{tpu_custom_call.1} parent=31 // pred_check_branch
          %259 = sbr.rel (%p257) target = $region36
        $region35: #{tpu_custom_call.1} parent=31 // pred_region
          %s260 = sand.u32 %s44, 1
          %s261 = scalar_lea.sflag [#allocation4], %s260
          %s262 = sand.u32 %s44, 1
          %s263 = smul.addr %s262, 256
          %s264 = scalar_lea.vmem [#allocation3], %s263
          %s265 = smul.u32 16, %s28
          %s266 = smul.u32 4, %s27
          %s268 = ssub.s32 4096, 4096
          %269 = vsyncadd %s261, %s268
          %s270 = smul.addr %s265, 8
          %s271 = sadd.s32 %s266, %s270
          %s272 = smul.addr %s271, 64
          %s273 = scalar_lea.hbm %s0, %s272
          %s274 = sshll.u32 %s264, 4
          %s275 = int_to_ptr.vmem [resolvable:$true] %s274
          %280 = dma.hbm_to_vmem [thread:$0]  %s273, 4096, %s275, %s261, 512, 256, 16
        $region36: #{tpu_custom_call.1} parent=31 // pred_fallthru
          _
        // Predicated region
        $region37: #{tpu_custom_call.1} parent=31 // pred_check
          %p281 = pneg %p80
        $region38: #{tpu_custom_call.1} parent=31 // pred_check_branch
          %283 = sbr.rel (%p281) target = $region40
        $region39: #{tpu_custom_call.1} parent=31 // pred_region
          %s284 = sand.u32 %s20, 1
          %s285 = scalar_lea.sflag [#allocation7], %s284
          %s286 = sand.u32 %s70, 1
          %s287 = smul.addr %s286, 512
          %s288 = scalar_lea.vmem [#allocation6], %s287
          %s289 = smul.u32 64, %s27
          %s291 = ssub.s32 8192, 8192
          %292 = vsyncadd %s285, %s291
          %s293 = smul.addr %s289, 2
          %s294 = smul.addr %s293, 64
          %s295 = scalar_lea.hbm %s1, %s294
          %s296 = sshll.u32 %s288, 4
          %s297 = int_to_ptr.vmem [resolvable:$true] %s296
          %302 = dma.hbm_to_vmem [thread:$0]  %s295, 8192, %s297, %s285, 128, 128, 8
        $region40: #{tpu_custom_call.1} parent=31 // pred_fallthru
          _
      $region32: #{tpu_custom_call.1} parent=5 // pred_fallthru
        _
      %p303 = scmp.le.s32.totalorder 1, %s20
      %p304 = scmp.lt.s32.totalorder %s20, 3
      %p305 = pnand %p303, %p304
      %p306 = pneg %p305
      // Predicated region
      $region41: #{tpu_custom_call.1} parent=5 // pred_check
        _
      $region42: #{tpu_custom_call.1} parent=5 // pred_check_branch
        %308 = sbr.rel (%p305) target = $region44
      $region43: #{tpu_custom_call.1} parent=5 // pred_region
        %s309 = ssub.s32 %s20, 1
        %s310 = sand.u32 %s47, 1
        %s311 = scalar_lea.sflag [#allocation4], %s310
        %s312 = sand.u32 %s47, 1
        %s313 = smul.addr %s312, 256
        %s314 = scalar_lea.vmem [#allocation3], %s313
        // Predicated region
        $region45: #{tpu_custom_call.1} parent=43 // pred_check
          %p315 = pneg %p60
        $region46: #{tpu_custom_call.1} parent=43 // pred_check_branch
          %317 = sbr.rel (%p315) target = $region48
        $region47: #{tpu_custom_call.1} parent=43 // pred_region
          %318 = dma.done %s311, 4096
        $region48: #{tpu_custom_call.1} parent=43 // pred_fallthru
          _
        %s319 = sand.u32 %s25, 1
        %s320 = scalar_lea.sflag [#allocation7], %s319
        %s321 = sand.u32 %s73, 1
        %s322 = smul.addr %s321, 512
        %s323 = scalar_lea.vmem [#allocation6], %s322
        // Predicated region
        $region49: #{tpu_custom_call.1} parent=43 // pred_check
          %p324 = pneg %p86
        $region50: #{tpu_custom_call.1} parent=43 // pred_check_branch
          %326 = sbr.rel (%p324) target = $region52
        $region51: #{tpu_custom_call.1} parent=43 // pred_region
          %327 = dma.done %s320, 8192
        $region52: #{tpu_custom_call.1} parent=43 // pred_fallthru
          _
        // Predicated region
        $region53: #{tpu_custom_call.1} parent=43 // pred_check
          %p328 = pneg %p107
        $region54: #{tpu_custom_call.1} parent=43 // pred_check_branch
          %330 = sbr.rel (%p328) target = $region56
        $region55: #{tpu_custom_call.1} parent=43 // pred_region
          %331 = dma.done [#allocation7], 2048
        $region56: #{tpu_custom_call.1} parent=43 // pred_fallthru
          _
        // Predicated region
        $region57: #{tpu_custom_call.1} parent=43 // pred_check
          %p332 = pneg %p128
        $region58: #{tpu_custom_call.1} parent=43 // pred_check_branch
          %334 = sbr.rel (%p332) target = $region60
        $region59: #{tpu_custom_call.1} parent=43 // pred_region
          %335 = dma.done [#allocation10], 1024
        $region60: #{tpu_custom_call.1} parent=43 // pred_fallthru
          _
        // Predicated region
        $region61: #{tpu_custom_call.1} parent=43 // pred_check
          %p336 = pneg %p149
        $region62: #{tpu_custom_call.1} parent=43 // pred_check_branch
          %338 = sbr.rel (%p336) target = $region64
        $region63: #{tpu_custom_call.1} parent=43 // pred_region
          %339 = dma.done [#allocation10], 1024
        $region64: #{tpu_custom_call.1} parent=43 // pred_fallthru
          _
        %s340 = sand.u32 %s47, 1
        %s341 = scalar_lea.sflag [#allocation4], %s340
        %s342 = sand.u32 %s47, 1
        %s343 = smul.addr %s342, 256
        %s344 = scalar_lea.vmem [#allocation3], %s343
        %p345 = pneg %p60
        %p346 = pneg %p57
        %s347 = sand.u32 %s25, 1
        %s348 = scalar_lea.sflag [#allocation7], %s347
        %s349 = sand.u32 %s73, 1
        %s350 = smul.addr %s349, 512
        %s351 = scalar_lea.vmem [#allocation6], %s350
        %p352 = pneg %p86
        %p353 = pneg %p83
        %p354 = pneg %p107
        %p355 = pneg %p104
        %p356 = pneg %p128
        %p357 = pneg %p125
        %p358 = pneg %p149
        %p359 = pneg %p146
        %p360 = pneg %p170
        %p361 = pneg %p167
        %p362 = pneg %p196
        %p363 = pneg %p193
        %s364 = smul.u32 16, %s30
        %s365 = smul.u32 4, %s29
        %s366 = smul.u32 64, %s29
        %s367 = smul.u32 16, %s30
        %p369 = scmp.eq.s32.totalorder %s29, 0
        // Predicated region
        $region65: #{tpu_custom_call.1} parent=43 // pred_check
          %p370 = pneg %p369
        $region66: #{tpu_custom_call.1} parent=43 // pred_check_branch
          %372 = sbr.rel (%p370) target = $region68
        $region67: #{tpu_custom_call.1} parent=43 // pred_region
          %s373 = smul.u32 %s30, 32
          %s374 = smul.addr %s373, 8
          %s375 = scalar_lea.vmem [#allocation2], %s374
          %376 = vst [vmem:[%s375] sm:$0xff] 0.0
          %377 = vst [vmem:[%s375 + $0x8] sm:$0xff] 0.0
          %378 = vst [vmem:[%s375 + $0x10] sm:$0xff] 0.0
          %379 = vst [vmem:[%s375 + $0x18] sm:$0xff] 0.0
          %380 = vst [vmem:[%s375 + $0x20] sm:$0xff] 0.0
          %381 = vst [vmem:[%s375 + $0x28] sm:$0xff] 0.0
          %382 = vst [vmem:[%s375 + $0x30] sm:$0xff] 0.0
          %383 = vst [vmem:[%s375 + $0x38] sm:$0xff] 0.0
          %384 = vst [vmem:[%s375 + $0x40] sm:$0xff] 0.0
          %385 = vst [vmem:[%s375 + $0x48] sm:$0xff] 0.0
          %386 = vst [vmem:[%s375 + $0x50] sm:$0xff] 0.0
          %387 = vst [vmem:[%s375 + $0x58] sm:$0xff] 0.0
          %388 = vst [vmem:[%s375 + $0x60] sm:$0xff] 0.0
          %389 = vst [vmem:[%s375 + $0x68] sm:$0xff] 0.0
          %390 = vst [vmem:[%s375 + $0x70] sm:$0xff] 0.0
          %391 = vst [vmem:[%s375 + $0x78] sm:$0xff] 0.0
          %392 = vst [vmem:[%s375 + $0x80] sm:$0xff] 0.0
          %393 = vst [vmem:[%s375 + $0x88] sm:$0xff] 0.0
          %394 = vst [vmem:[%s375 + $0x90] sm:$0xff] 0.0
          %395 = vst [vmem:[%s375 + $0x98] sm:$0xff] 0.0
          %396 = vst [vmem:[%s375 + $0xa0] sm:$0xff] 0.0
          %397 = vst [vmem:[%s375 + $0xa8] sm:$0xff] 0.0
          %398 = vst [vmem:[%s375 + $0xb0] sm:$0xff] 0.0
          %399 = vst [vmem:[%s375 + $0xb8] sm:$0xff] 0.0
          %400 = vst [vmem:[%s375 + $0xc0] sm:$0xff] 0.0
          %401 = vst [vmem:[%s375 + $0xc8] sm:$0xff] 0.0
          %402 = vst [vmem:[%s375 + $0xd0] sm:$0xff] 0.0
          %403 = vst [vmem:[%s375 + $0xd8] sm:$0xff] 0.0
          %404 = vst [vmem:[%s375 + $0xe0] sm:$0xff] 0.0
          %405 = vst [vmem:[%s375 + $0xe8] sm:$0xff] 0.0
          %406 = vst [vmem:[%s375 + $0xf0] sm:$0xff] 0.0
          %407 = vst [vmem:[%s375 + $0xf8] sm:$0xff] 0.0
        $region68: #{tpu_custom_call.1} parent=43 // pred_fallthru
          _
        %s408 = smul.u32 %s30, 32
        %s409 = smul.addr %s408, 8
        %s410 = scalar_lea.vmem [#allocation2], %s409
        %v411 = vld [vmem:[%s410] sm:$0xff]
        %v412 = vld [vmem:[%s410 + $0x8] sm:$0xff]
        %v413 = vld [vmem:[%s410 + $0x10] sm:$0xff]
        %v414 = vld [vmem:[%s410 + $0x18] sm:$0xff]
        %v415 = vld [vmem:[%s410 + $0x20] sm:$0xff]
        %v416 = vld [vmem:[%s410 + $0x28] sm:$0xff]
        %v417 = vld [vmem:[%s410 + $0x30] sm:$0xff]
        %v418 = vld [vmem:[%s410 + $0x38] sm:$0xff]
        %v419 = vld [vmem:[%s410 + $0x40] sm:$0xff]
        %v420 = vld [vmem:[%s410 + $0x48] sm:$0xff]
        %v421 = vld [vmem:[%s410 + $0x50] sm:$0xff]
        %v422 = vld [vmem:[%s410 + $0x58] sm:$0xff]
        %v423 = vld [vmem:[%s410 + $0x60] sm:$0xff]
        %v424 = vld [vmem:[%s410 + $0x68] sm:$0xff]
        %v425 = vld [vmem:[%s410 + $0x70] sm:$0xff]
        %v426 = vld [vmem:[%s410 + $0x78] sm:$0xff]
        %v427 = vld [vmem:[%s410 + $0x80] sm:$0xff]
        %v428 = vld [vmem:[%s410 + $0x88] sm:$0xff]
        %v429 = vld [vmem:[%s410 + $0x90] sm:$0xff]
        %v430 = vld [vmem:[%s410 + $0x98] sm:$0xff]
        %v431 = vld [vmem:[%s410 + $0xa0] sm:$0xff]
        %v432 = vld [vmem:[%s410 + $0xa8] sm:$0xff]
        %v433 = vld [vmem:[%s410 + $0xb0] sm:$0xff]
        %v434 = vld [vmem:[%s410 + $0xb8] sm:$0xff]
        %v435 = vld [vmem:[%s410 + $0xc0] sm:$0xff]
        %v436 = vld [vmem:[%s410 + $0xc8] sm:$0xff]
        %v437 = vld [vmem:[%s410 + $0xd0] sm:$0xff]
        %v438 = vld [vmem:[%s410 + $0xd8] sm:$0xff]
        %v439 = vld [vmem:[%s410 + $0xe0] sm:$0xff]
        %v440 = vld [vmem:[%s410 + $0xe8] sm:$0xff]
        %v441 = vld [vmem:[%s410 + $0xf0] sm:$0xff]
        %v442 = vld [vmem:[%s410 + $0xf8] sm:$0xff]
        %v443 = vld [vmem:[%s314] sm:$0xff]
        %v444 = vld [vmem:[%s314 + $0x8] sm:$0xff]
        %v445 = vld [vmem:[%s314 + $0x10] sm:$0xff]
        %v446 = vld [vmem:[%s314 + $0x18] sm:$0xff]
        %v447 = vld [vmem:[%s314 + $0x20] sm:$0xff]
        %v448 = vld [vmem:[%s314 + $0x28] sm:$0xff]
        %v449 = vld [vmem:[%s314 + $0x30] sm:$0xff]
        %v450 = vld [vmem:[%s314 + $0x38] sm:$0xff]
        %v451 = vld [vmem:[%s314 + $0x40] sm:$0xff]
        %v452 = vld [vmem:[%s314 + $0x48] sm:$0xff]
        %v453 = vld [vmem:[%s314 + $0x50] sm:$0xff]
        %v454 = vld [vmem:[%s314 + $0x58] sm:$0xff]
        %v455 = vld [vmem:[%s314 + $0x60] sm:$0xff]
        %v456 = vld [vmem:[%s314 + $0x68] sm:$0xff]
        %v457 = vld [vmem:[%s314 + $0x70] sm:$0xff]
        %v458 = vld [vmem:[%s314 + $0x78] sm:$0xff]
        %v459 = vld [vmem:[%s314 + $0x80] sm:$0xff]
        %v460 = vld [vmem:[%s314 + $0x88] sm:$0xff]
        %v461 = vld [vmem:[%s314 + $0x90] sm:$0xff]
        %v462 = vld [vmem:[%s314 + $0x98] sm:$0xff]
        %v463 = vld [vmem:[%s314 + $0xa0] sm:$0xff]
        %v464 = vld [vmem:[%s314 + $0xa8] sm:$0xff]
        %v465 = vld [vmem:[%s314 + $0xb0] sm:$0xff]
        %v466 = vld [vmem:[%s314 + $0xb8] sm:$0xff]
        %v467 = vld [vmem:[%s314 + $0xc0] sm:$0xff]
        %v468 = vld [vmem:[%s314 + $0xc8] sm:$0xff]
        %v469 = vld [vmem:[%s314 + $0xd0] sm:$0xff]
        %v470 = vld [vmem:[%s314 + $0xd8] sm:$0xff]
        %v471 = vld [vmem:[%s314 + $0xe0] sm:$0xff]
        %v472 = vld [vmem:[%s314 + $0xe8] sm:$0xff]
        %v473 = vld [vmem:[%s314 + $0xf0] sm:$0xff]
        %v474 = vld [vmem:[%s314 + $0xf8] sm:$0xff]
        %v475 = vld [vmem:[%s323] sm:$0xff]
        %v476 = vld [vmem:[%s323 + $0x8] sm:$0xff]
        %v477 = vld [vmem:[%s323 + $0x10] sm:$0xff]
        %v478 = vld [vmem:[%s323 + $0x18] sm:$0xff]
        %v479 = vld [vmem:[%s323 + $0x20] sm:$0xff]
        %v480 = vld [vmem:[%s323 + $0x28] sm:$0xff]
        %v481 = vld [vmem:[%s323 + $0x30] sm:$0xff]
        %v482 = vld [vmem:[%s323 + $0x38] sm:$0xff]
        %v483 = vld [vmem:[%s323 + $0x40] sm:$0xff]
        %v484 = vld [vmem:[%s323 + $0x48] sm:$0xff]
        %v485 = vld [vmem:[%s323 + $0x50] sm:$0xff]
        %v486 = vld [vmem:[%s323 + $0x58] sm:$0xff]
        %v487 = vld [vmem:[%s323 + $0x60] sm:$0xff]
        %v488 = vld [vmem:[%s323 + $0x68] sm:$0xff]
        %v489 = vld [vmem:[%s323 + $0x70] sm:$0xff]
        %v490 = vld [vmem:[%s323 + $0x78] sm:$0xff]
        %v491 = vld [vmem:[%s323 + $0x80] sm:$0xff]
        %v492 = vld [vmem:[%s323 + $0x88] sm:$0xff]
        %v493 = vld [vmem:[%s323 + $0x90] sm:$0xff]
        %v494 = vld [vmem:[%s323 + $0x98] sm:$0xff]
        %v495 = vld [vmem:[%s323 + $0xa0] sm:$0xff]
        %v496 = vld [vmem:[%s323 + $0xa8] sm:$0xff]
        %v497 = vld [vmem:[%s323 + $0xb0] sm:$0xff]
        %v498 = vld [vmem:[%s323 + $0xb8] sm:$0xff]
        %v499 = vld [vmem:[%s323 + $0xc0] sm:$0xff]
        %v500 = vld [vmem:[%s323 + $0xc8] sm:$0xff]
        %v501 = vld [vmem:[%s323 + $0xd0] sm:$0xff]
        %v502 = vld [vmem:[%s323 + $0xd8] sm:$0xff]
        %v503 = vld [vmem:[%s323 + $0xe0] sm:$0xff]
        %v504 = vld [vmem:[%s323 + $0xe8] sm:$0xff]
        %v505 = vld [vmem:[%s323 + $0xf0] sm:$0xff]
        %v506 = vld [vmem:[%s323 + $0xf8] sm:$0xff]
        %v507 = vld [vmem:[%s323 + $0x100] sm:$0xff]
        %v508 = vld [vmem:[%s323 + $0x108] sm:$0xff]
        %v509 = vld [vmem:[%s323 + $0x110] sm:$0xff]
        %v510 = vld [vmem:[%s323 + $0x118] sm:$0xff]
        %v511 = vld [vmem:[%s323 + $0x120] sm:$0xff]
        %v512 = vld [vmem:[%s323 + $0x128] sm:$0xff]
        %v513 = vld [vmem:[%s323 + $0x130] sm:$0xff]
        %v514 = vld [vmem:[%s323 + $0x138] sm:$0xff]
        %v515 = vld [vmem:[%s323 + $0x140] sm:$0xff]
        %v516 = vld [vmem:[%s323 + $0x148] sm:$0xff]
        %v517 = vld [vmem:[%s323 + $0x150] sm:$0xff]
        %v518 = vld [vmem:[%s323 + $0x158] sm:$0xff]
        %v519 = vld [vmem:[%s323 + $0x160] sm:$0xff]
        %v520 = vld [vmem:[%s323 + $0x168] sm:$0xff]
        %v521 = vld [vmem:[%s323 + $0x170] sm:$0xff]
        %v522 = vld [vmem:[%s323 + $0x178] sm:$0xff]
        %v523 = vld [vmem:[%s323 + $0x180] sm:$0xff]
        %v524 = vld [vmem:[%s323 + $0x188] sm:$0xff]
        %v525 = vld [vmem:[%s323 + $0x190] sm:$0xff]
        %v526 = vld [vmem:[%s323 + $0x198] sm:$0xff]
        %v527 = vld [vmem:[%s323 + $0x1a0] sm:$0xff]
        %v528 = vld [vmem:[%s323 + $0x1a8] sm:$0xff]
        %v529 = vld [vmem:[%s323 + $0x1b0] sm:$0xff]
        %v530 = vld [vmem:[%s323 + $0x1b8] sm:$0xff]
        %v531 = vld [vmem:[%s323 + $0x1c0] sm:$0xff]
        %v532 = vld [vmem:[%s323 + $0x1c8] sm:$0xff]
        %v533 = vld [vmem:[%s323 + $0x1d0] sm:$0xff]
        %v534 = vld [vmem:[%s323 + $0x1d8] sm:$0xff]
        %v535 = vld [vmem:[%s323 + $0x1e0] sm:$0xff]
        %v536 = vld [vmem:[%s323 + $0x1e8] sm:$0xff]
        %v537 = vld [vmem:[%s323 + $0x1f0] sm:$0xff]
        %v538 = vld [vmem:[%s323 + $0x1f8] sm:$0xff]
        %v571 = vunpack.c.l.b16 %v443
        %v572 = vunpack.c.h.b16 %v443
        %v573 = vunpack.c.l.b16 %v444
        %v574 = vunpack.c.h.b16 %v444
        %v575 = vunpack.c.l.b16 %v445
        %v576 = vunpack.c.h.b16 %v445
        %v577 = vunpack.c.l.b16 %v446
        %v578 = vunpack.c.h.b16 %v446
        %v579 = vunpack.c.l.b16 %v447
        %v580 = vunpack.c.h.b16 %v447
        %v581 = vunpack.c.l.b16 %v448
        %v582 = vunpack.c.h.b16 %v448
        %v583 = vunpack.c.l.b16 %v449
        %v584 = vunpack.c.h.b16 %v449
        %v585 = vunpack.c.l.b16 %v450
        %v586 = vunpack.c.h.b16 %v450
        %v587 = vunpack.c.l.b16 %v451
        %v588 = vunpack.c.h.b16 %v451
        %v589 = vunpack.c.l.b16 %v452
        %v590 = vunpack.c.h.b16 %v452
        %v591 = vunpack.c.l.b16 %v453
        %v592 = vunpack.c.h.b16 %v453
        %v593 = vunpack.c.l.b16 %v454
        %v594 = vunpack.c.h.b16 %v454
        %v595 = vunpack.c.l.b16 %v455
        %v596 = vunpack.c.h.b16 %v455
        %v597 = vunpack.c.l.b16 %v456
        %v598 = vunpack.c.h.b16 %v456
        %v599 = vunpack.c.l.b16 %v457
        %v600 = vunpack.c.h.b16 %v457
        %v601 = vunpack.c.l.b16 %v458
        %v602 = vunpack.c.h.b16 %v458
        %v603 = vunpack.c.l.b16 %v459
        %v604 = vunpack.c.h.b16 %v459
        %v605 = vunpack.c.l.b16 %v460
        %v606 = vunpack.c.h.b16 %v460
        %v607 = vunpack.c.l.b16 %v461
        %v608 = vunpack.c.h.b16 %v461
        %v609 = vunpack.c.l.b16 %v462
        %v610 = vunpack.c.h.b16 %v462
        %v611 = vunpack.c.l.b16 %v463
        %v612 = vunpack.c.h.b16 %v463
        %v613 = vunpack.c.l.b16 %v464
        %v614 = vunpack.c.h.b16 %v464
        %v615 = vunpack.c.l.b16 %v465
        %v616 = vunpack.c.h.b16 %v465
        %v617 = vunpack.c.l.b16 %v466
        %v618 = vunpack.c.h.b16 %v466
        %v619 = vunpack.c.l.b16 %v467
        %v620 = vunpack.c.h.b16 %v467
        %v621 = vunpack.c.l.b16 %v468
        %v622 = vunpack.c.h.b16 %v468
        %v623 = vunpack.c.l.b16 %v469
        %v624 = vunpack.c.h.b16 %v469
        %v625 = vunpack.c.l.b16 %v470
        %v626 = vunpack.c.h.b16 %v470
        %v627 = vunpack.c.l.b16 %v471
        %v628 = vunpack.c.h.b16 %v471
        %v629 = vunpack.c.l.b16 %v472
        %v630 = vunpack.c.h.b16 %v472
        %v631 = vunpack.c.l.b16 %v473
        %v632 = vunpack.c.h.b16 %v473
        %v633 = vunpack.c.l.b16 %v474
        %v634 = vunpack.c.h.b16 %v474
        %v635 = vpack.c.b16 %v575, %v571
        %v636 = vpack.c.b16 %v576, %v572
        %v637 = vpack.c.b16 %v577, %v573
        %v638 = vpack.c.b16 %v578, %v574
        %v639 = vpack.c.b16 %v583, %v579
        %v640 = vpack.c.b16 %v584, %v580
        %v641 = vpack.c.b16 %v585, %v581
        %v642 = vpack.c.b16 %v586, %v582
        %v643 = vpack.c.b16 %v591, %v587
        %v644 = vpack.c.b16 %v592, %v588
        %v645 = vpack.c.b16 %v593, %v589
        %v646 = vpack.c.b16 %v594, %v590
        %v647 = vpack.c.b16 %v599, %v595
        %v648 = vpack.c.b16 %v600, %v596
        %v649 = vpack.c.b16 %v601, %v597
        %v650 = vpack.c.b16 %v602, %v598
        %v651 = vpack.c.b16 %v607, %v603
        %v652 = vpack.c.b16 %v608, %v604
        %v653 = vpack.c.b16 %v609, %v605
        %v654 = vpack.c.b16 %v610, %v606
        %v655 = vpack.c.b16 %v615, %v611
        %v656 = vpack.c.b16 %v616, %v612
        %v657 = vpack.c.b16 %v617, %v613
        %v658 = vpack.c.b16 %v618, %v614
        %v659 = vpack.c.b16 %v623, %v619
        %v660 = vpack.c.b16 %v624, %v620
        %v661 = vpack.c.b16 %v625, %v621
        %v662 = vpack.c.b16 %v626, %v622
        %v663 = vpack.c.b16 %v631, %v627
        %v664 = vpack.c.b16 %v632, %v628
        %v665 = vpack.c.b16 %v633, %v629
        %v666 = vpack.c.b16 %v634, %v630
        %v763 = vunpack.c.l.b16 %v475
        %v764 = vunpack.c.h.b16 %v475
        %v765 = vunpack.c.l.b16 %v476
        %v766 = vunpack.c.h.b16 %v476
        %v767 = vunpack.c.l.b16 %v477
        %v768 = vunpack.c.h.b16 %v477
        %v769 = vunpack.c.l.b16 %v478
        %v770 = vunpack.c.h.b16 %v478
        %v771 = vunpack.c.l.b16 %v479
        %v772 = vunpack.c.h.b16 %v479
        %v773 = vunpack.c.l.b16 %v480
        %v774 = vunpack.c.h.b16 %v480
        %v775 = vunpack.c.l.b16 %v481
        %v776 = vunpack.c.h.b16 %v481
        %v777 = vunpack.c.l.b16 %v482
        %v778 = vunpack.c.h.b16 %v482
        %v779 = vunpack.c.l.b16 %v483
        %v780 = vunpack.c.h.b16 %v483
        %v781 = vunpack.c.l.b16 %v484
        %v782 = vunpack.c.h.b16 %v484
        %v783 = vunpack.c.l.b16 %v485
        %v784 = vunpack.c.h.b16 %v485
        %v785 = vunpack.c.l.b16 %v486
        %v786 = vunpack.c.h.b16 %v486
        %v787 = vunpack.c.l.b16 %v487
        %v788 = vunpack.c.h.b16 %v487
        %v789 = vunpack.c.l.b16 %v488
        %v790 = vunpack.c.h.b16 %v488
        %v791 = vunpack.c.l.b16 %v489
        %v792 = vunpack.c.h.b16 %v489
        %v793 = vunpack.c.l.b16 %v490
        %v794 = vunpack.c.h.b16 %v490
        %v795 = vunpack.c.l.b16 %v491
        %v796 = vunpack.c.h.b16 %v491
        %v797 = vunpack.c.l.b16 %v492
        %v798 = vunpack.c.h.b16 %v492
        %v799 = vunpack.c.l.b16 %v493
        %v800 = vunpack.c.h.b16 %v493
        %v801 = vunpack.c.l.b16 %v494
        %v802 = vunpack.c.h.b16 %v494
        %v803 = vunpack.c.l.b16 %v495
        %v804 = vunpack.c.h.b16 %v495
        %v805 = vunpack.c.l.b16 %v496
        %v806 = vunpack.c.h.b16 %v496
        %v807 = vunpack.c.l.b16 %v497
        %v808 = vunpack.c.h.b16 %v497
        %v809 = vunpack.c.l.b16 %v498
        %v810 = vunpack.c.h.b16 %v498
        %v811 = vunpack.c.l.b16 %v499
        %v812 = vunpack.c.h.b16 %v499
        %v813 = vunpack.c.l.b16 %v500
        %v814 = vunpack.c.h.b16 %v500
        %v815 = vunpack.c.l.b16 %v501
        %v816 = vunpack.c.h.b16 %v501
        %v817 = vunpack.c.l.b16 %v502
        %v818 = vunpack.c.h.b16 %v502
        %v819 = vunpack.c.l.b16 %v503
        %v820 = vunpack.c.h.b16 %v503
        %v821 = vunpack.c.l.b16 %v504
        %v822 = vunpack.c.h.b16 %v504
        %v823 = vunpack.c.l.b16 %v505
        %v824 = vunpack.c.h.b16 %v505
        %v825 = vunpack.c.l.b16 %v506
        %v826 = vunpack.c.h.b16 %v506
        %v827 = vunpack.c.l.b16 %v507
        %v828 = vunpack.c.h.b16 %v507
        %v829 = vunpack.c.l.b16 %v508
        %v830 = vunpack.c.h.b16 %v508
        %v831 = vunpack.c.l.b16 %v509
        %v832 = vunpack.c.h.b16 %v509
        %v833 = vunpack.c.l.b16 %v510
        %v834 = vunpack.c.h.b16 %v510
        %v835 = vunpack.c.l.b16 %v511
        %v836 = vunpack.c.h.b16 %v511
        %v837 = vunpack.c.l.b16 %v512
        %v838 = vunpack.c.h.b16 %v512
        %v839 = vunpack.c.l.b16 %v513
        %v840 = vunpack.c.h.b16 %v513
        %v841 = vunpack.c.l.b16 %v514
        %v842 = vunpack.c.h.b16 %v514
        %v843 = vunpack.c.l.b16 %v515
        %v844 = vunpack.c.h.b16 %v515
        %v845 = vunpack.c.l.b16 %v516
        %v846 = vunpack.c.h.b16 %v516
        %v847 = vunpack.c.l.b16 %v517
        %v848 = vunpack.c.h.b16 %v517
        %v849 = vunpack.c.l.b16 %v518
        %v850 = vunpack.c.h.b16 %v518
        %v851 = vunpack.c.l.b16 %v519
        %v852 = vunpack.c.h.b16 %v519
        %v853 = vunpack.c.l.b16 %v520
        %v854 = vunpack.c.h.b16 %v520
        %v855 = vunpack.c.l.b16 %v521
        %v856 = vunpack.c.h.b16 %v521
        %v857 = vunpack.c.l.b16 %v522
        %v858 = vunpack.c.h.b16 %v522
        %v859 = vunpack.c.l.b16 %v523
        %v860 = vunpack.c.h.b16 %v523
        %v861 = vunpack.c.l.b16 %v524
        %v862 = vunpack.c.h.b16 %v524
        %v863 = vunpack.c.l.b16 %v525
        %v864 = vunpack.c.h.b16 %v525
        %v865 = vunpack.c.l.b16 %v526
        %v866 = vunpack.c.h.b16 %v526
        %v867 = vunpack.c.l.b16 %v527
        %v868 = vunpack.c.h.b16 %v527
        %v869 = vunpack.c.l.b16 %v528
        %v870 = vunpack.c.h.b16 %v528
        %v871 = vunpack.c.l.b16 %v529
        %v872 = vunpack.c.h.b16 %v529
        %v873 = vunpack.c.l.b16 %v530
        %v874 = vunpack.c.h.b16 %v530
        %v875 = vunpack.c.l.b16 %v531
        %v876 = vunpack.c.h.b16 %v531
        %v877 = vunpack.c.l.b16 %v532
        %v878 = vunpack.c.h.b16 %v532
        %v879 = vunpack.c.l.b16 %v533
        %v880 = vunpack.c.h.b16 %v533
        %v881 = vunpack.c.l.b16 %v534
        %v882 = vunpack.c.h.b16 %v534
        %v883 = vunpack.c.l.b16 %v535
        %v884 = vunpack.c.h.b16 %v535
        %v885 = vunpack.c.l.b16 %v536
        %v886 = vunpack.c.h.b16 %v536
        %v887 = vunpack.c.l.b16 %v537
        %v888 = vunpack.c.h.b16 %v537
        %v889 = vunpack.c.l.b16 %v538
        %v890 = vunpack.c.h.b16 %v538
        %v891 = vpack.c.b16 %v765, %v763
        %v892 = vpack.c.b16 %v766, %v764
        %v893 = vpack.c.b16 %v769, %v767
        %v894 = vpack.c.b16 %v770, %v768
        %v895 = vpack.c.b16 %v773, %v771
        %v896 = vpack.c.b16 %v774, %v772
        %v897 = vpack.c.b16 %v777, %v775
        %v898 = vpack.c.b16 %v778, %v776
        %v899 = vpack.c.b16 %v781, %v779
        %v900 = vpack.c.b16 %v782, %v780
        %v901 = vpack.c.b16 %v785, %v783
        %v902 = vpack.c.b16 %v786, %v784
        %v903 = vpack.c.b16 %v789, %v787
        %v904 = vpack.c.b16 %v790, %v788
        %v905 = vpack.c.b16 %v793, %v791
        %v906 = vpack.c.b16 %v794, %v792
        %v907 = vpack.c.b16 %v797, %v795
        %v908 = vpack.c.b16 %v798, %v796
        %v909 = vpack.c.b16 %v801, %v799
        %v910 = vpack.c.b16 %v802, %v800
        %v911 = vpack.c.b16 %v805, %v803
        %v912 = vpack.c.b16 %v806, %v804
        %v913 = vpack.c.b16 %v809, %v807
        %v914 = vpack.c.b16 %v810, %v808
        %v915 = vpack.c.b16 %v813, %v811
        %v916 = vpack.c.b16 %v814, %v812
        %v917 = vpack.c.b16 %v817, %v815
        %v918 = vpack.c.b16 %v818, %v816
        %v919 = vpack.c.b16 %v821, %v819
        %v920 = vpack.c.b16 %v822, %v820
        %v921 = vpack.c.b16 %v825, %v823
        %v922 = vpack.c.b16 %v826, %v824
        %v923 = vpack.c.b16 %v829, %v827
        %v924 = vpack.c.b16 %v830, %v828
        %v925 = vpack.c.b16 %v833, %v831
        %v926 = vpack.c.b16 %v834, %v832
        %v927 = vpack.c.b16 %v837, %v835
        %v928 = vpack.c.b16 %v838, %v836
        %v929 = vpack.c.b16 %v841, %v839
        %v930 = vpack.c.b16 %v842, %v840
        %v931 = vpack.c.b16 %v845, %v843
        %v932 = vpack.c.b16 %v846, %v844
        %v933 = vpack.c.b16 %v849, %v847
        %v934 = vpack.c.b16 %v850, %v848
        %v935 = vpack.c.b16 %v853, %v851
        %v936 = vpack.c.b16 %v854, %v852
        %v937 = vpack.c.b16 %v857, %v855
        %v938 = vpack.c.b16 %v858, %v856
        %v939 = vpack.c.b16 %v861, %v859
        %v940 = vpack.c.b16 %v862, %v860
        %v941 = vpack.c.b16 %v865, %v863
        %v942 = vpack.c.b16 %v866, %v864
        %v943 = vpack.c.b16 %v869, %v867
        %v944 = vpack.c.b16 %v870, %v868
        %v945 = vpack.c.b16 %v873, %v871
        %v946 = vpack.c.b16 %v874, %v872
        %v947 = vpack.c.b16 %v877, %v875
        %v948 = vpack.c.b16 %v878, %v876
        %v949 = vpack.c.b16 %v881, %v879
        %v950 = vpack.c.b16 %v882, %v880
        %v951 = vpack.c.b16 %v885, %v883
        %v952 = vpack.c.b16 %v886, %v884
        %v953 = vpack.c.b16 %v889, %v887
        %v954 = vpack.c.b16 %v890, %v888
        %1019 = vmatprep.subr.bf16.mxu0 %v906
        %1020 = vmatpush1.bf16.msra.mxu0 %v905
        %1021 = vmatprep.subr.bf16.mxu0 %v904
        %1022 = vmatpush1.bf16.msra.mxu0 %v903
        %1023 = vmatprep.subr.bf16.mxu0 %v902
        %1024 = vmatpush1.bf16.msra.mxu0 %v901
        %1025 = vmatprep.subr.bf16.mxu0 %v900
        %1026 = vmatpush1.bf16.msra.mxu0 %v899
        %1027 = vmatprep.subr.bf16.mxu0 %v898
        %1028 = vmatpush1.bf16.msra.mxu0 %v897
        %1029 = vmatprep.subr.bf16.mxu0 %v896
        %1030 = vmatpush1.bf16.msra.mxu0 %v895
        %1031 = vmatprep.subr.bf16.mxu0 %v894
        %1032 = vmatpush1.bf16.msra.mxu0 %v893
        %1033 = vmatprep.subr.bf16.mxu0 %v892
        %1034 = vmatpush1.bf16.msra.mxu0 %v891
        %1035 = vmatprep.subr.bf16.mxu0 %v922
        %1036 = vmatpush2.bf16.msra.mxu0 %v921
        %1037 = vmatprep.subr.bf16.mxu0 %v920
        %1038 = vmatpush2.bf16.msra.mxu0 %v919
        %1039 = vmatprep.subr.bf16.mxu0 %v918
        %1040 = vmatpush2.bf16.msra.mxu0 %v917
        %1041 = vmatprep.subr.bf16.mxu0 %v916
        %1042 = vmatpush2.bf16.msra.mxu0 %v915
        %1043 = vmatprep.subr.bf16.mxu0 %v914
        %1044 = vmatpush2.bf16.msra.mxu0 %v913
        %1045 = vmatprep.subr.bf16.mxu0 %v912
        %1046 = vmatpush2.bf16.msra.mxu0 %v911
        %1047 = vmatprep.subr.bf16.mxu0 %v910
        %1048 = vmatpush2.bf16.msra.mxu0 %v909
        %1049 = vmatprep.subr.bf16.mxu0 %v908
        %1050 = vmatpush2.bf16.msra.mxu0 %v907
        %1051 = vmatprep.mubr.bf16.mxu0 %v636
        %1052 = vmatmul.mubr.bf16.gmra.mxu0 %v635
        %v1053 = vpop.f32.mrf.mxu0
        %v1054 = vadd.f32 0.0, %v1053
        %v1055 = vpop.f32.mrf.mxu0
        %v1056 = vadd.f32 0.0, %v1055
        %v1057 = vpop.f32.mrf.mxu0
        %v1058 = vadd.f32 0.0, %v1057
        %v1059 = vpop.f32.mrf.mxu0
        %v1060 = vadd.f32 0.0, %v1059
        %1061 = vmatprep.mubr.bf16.mxu0 %v640
        %1062 = vmatmul.mubr.bf16.gmra.mxu0 %v639
        %v1063 = vpop.f32.mrf.mxu0
        %v1064 = vadd.f32 0.0, %v1063
        %v1065 = vpop.f32.mrf.mxu0
        %v1066 = vadd.f32 0.0, %v1065
        %v1067 = vpop.f32.mrf.mxu0
        %v1068 = vadd.f32 0.0, %v1067
        %v1069 = vpop.f32.mrf.mxu0
        %v1070 = vadd.f32 0.0, %v1069
        %1071 = vmatprep.mubr.bf16.mxu0 %v644
        %1072 = vmatmul.mubr.bf16.gmra.mxu0 %v643
        %v1073 = vpop.f32.mrf.mxu0
        %v1074 = vadd.f32 0.0, %v1073
        %v1075 = vpop.f32.mrf.mxu0
        %v1076 = vadd.f32 0.0, %v1075
        %v1077 = vpop.f32.mrf.mxu0
        %v1078 = vadd.f32 0.0, %v1077
        %v1079 = vpop.f32.mrf.mxu0
        %v1080 = vadd.f32 0.0, %v1079
        %1081 = vmatprep.mubr.bf16.mxu0 %v648
        %1082 = vmatmul.mubr.bf16.gmra.mxu0 %v647
        %v1083 = vpop.f32.mrf.mxu0
        %v1084 = vadd.f32 0.0, %v1083
        %v1085 = vpop.f32.mrf.mxu0
        %v1086 = vadd.f32 0.0, %v1085
        %v1087 = vpop.f32.mrf.mxu0
        %v1088 = vadd.f32 0.0, %v1087
        %v1089 = vpop.f32.mrf.mxu0
        %v1090 = vadd.f32 0.0, %v1089
        %1091 = vmatprep.mubr.bf16.mxu0 %v652
        %1092 = vmatmul.mubr.bf16.gmra.mxu0 %v651
        %v1093 = vpop.f32.mrf.mxu0
        %v1094 = vadd.f32 0.0, %v1093
        %v1095 = vpop.f32.mrf.mxu0
        %v1096 = vadd.f32 0.0, %v1095
        %v1097 = vpop.f32.mrf.mxu0
        %v1098 = vadd.f32 0.0, %v1097
        %v1099 = vpop.f32.mrf.mxu0
        %v1100 = vadd.f32 0.0, %v1099
        %1101 = vmatprep.mubr.bf16.mxu0 %v656
        %1102 = vmatmul.mubr.bf16.gmra.mxu0 %v655
        %v1103 = vpop.f32.mrf.mxu0
        %v1104 = vadd.f32 0.0, %v1103
        %v1105 = vpop.f32.mrf.mxu0
        %v1106 = vadd.f32 0.0, %v1105
        %v1107 = vpop.f32.mrf.mxu0
        %v1108 = vadd.f32 0.0, %v1107
        %v1109 = vpop.f32.mrf.mxu0
        %v1110 = vadd.f32 0.0, %v1109
        %1111 = vmatprep.mubr.bf16.mxu0 %v660
        %1112 = vmatmul.mubr.bf16.gmra.mxu0 %v659
        %v1113 = vpop.f32.mrf.mxu0
        %v1114 = vadd.f32 0.0, %v1113
        %v1115 = vpop.f32.mrf.mxu0
        %v1116 = vadd.f32 0.0, %v1115
        %v1117 = vpop.f32.mrf.mxu0
        %v1118 = vadd.f32 0.0, %v1117
        %v1119 = vpop.f32.mrf.mxu0
        %v1120 = vadd.f32 0.0, %v1119
        %1121 = vmatprep.mubr.bf16.mxu0 %v664
        %1122 = vmatmul.mubr.bf16.gmra.mxu0 %v663
        %v1123 = vpop.f32.mrf.mxu0
        %v1124 = vadd.f32 0.0, %v1123
        %v1125 = vpop.f32.mrf.mxu0
        %v1126 = vadd.f32 0.0, %v1125
        %v1127 = vpop.f32.mrf.mxu0
        %v1128 = vadd.f32 0.0, %v1127
        %v1129 = vpop.f32.mrf.mxu0
        %v1130 = vadd.f32 0.0, %v1129
        %1131 = vdwg.mxu0
        %1132 = vmatprep.subr.bf16.mxu0 %v938
        %1133 = vmatpush1.bf16.msra.mxu0 %v937
        %1134 = vmatprep.subr.bf16.mxu0 %v936
        %1135 = vmatpush1.bf16.msra.mxu0 %v935
        %1136 = vmatprep.subr.bf16.mxu0 %v934
        %1137 = vmatpush1.bf16.msra.mxu0 %v933
        %1138 = vmatprep.subr.bf16.mxu0 %v932
        %1139 = vmatpush1.bf16.msra.mxu0 %v931
        %1140 = vmatprep.subr.bf16.mxu0 %v930
        %1141 = vmatpush1.bf16.msra.mxu0 %v929
        %1142 = vmatprep.subr.bf16.mxu0 %v928
        %1143 = vmatpush1.bf16.msra.mxu0 %v927
        %1144 = vmatprep.subr.bf16.mxu0 %v926
        %1145 = vmatpush1.bf16.msra.mxu0 %v925
        %1146 = vmatprep.subr.bf16.mxu0 %v924
        %1147 = vmatpush1.bf16.msra.mxu0 %v923
        %1148 = vmatprep.subr.bf16.mxu0 %v954
        %1149 = vmatpush2.bf16.msra.mxu0 %v953
        %1150 = vmatprep.subr.bf16.mxu0 %v952
        %1151 = vmatpush2.bf16.msra.mxu0 %v951
        %1152 = vmatprep.subr.bf16.mxu0 %v950
        %1153 = vmatpush2.bf16.msra.mxu0 %v949
        %1154 = vmatprep.subr.bf16.mxu0 %v948
        %1155 = vmatpush2.bf16.msra.mxu0 %v947
        %1156 = vmatprep.subr.bf16.mxu0 %v946
        %1157 = vmatpush2.bf16.msra.mxu0 %v945
        %1158 = vmatprep.subr.bf16.mxu0 %v944
        %1159 = vmatpush2.bf16.msra.mxu0 %v943
        %1160 = vmatprep.subr.bf16.mxu0 %v942
        %1161 = vmatpush2.bf16.msra.mxu0 %v941
        %1162 = vmatprep.subr.bf16.mxu0 %v940
        %1163 = vmatpush2.bf16.msra.mxu0 %v939
        %1164 = vmatprep.mubr.bf16.mxu0 %v638
        %1165 = vmatmul.mubr.bf16.gmra.mxu0 %v637
        %v1166 = vpop.f32.mrf.mxu0
        %v1167 = vadd.f32 %v1054, %v1166
        %v1168 = vpop.f32.mrf.mxu0
        %v1169 = vadd.f32 %v1056, %v1168
        %v1170 = vpop.f32.mrf.mxu0
        %v1171 = vadd.f32 %v1058, %v1170
        %v1172 = vpop.f32.mrf.mxu0
        %v1173 = vadd.f32 %v1060, %v1172
        %1174 = vmatprep.mubr.bf16.mxu0 %v642
        %1175 = vmatmul.mubr.bf16.gmra.mxu0 %v641
        %v1176 = vpop.f32.mrf.mxu0
        %v1177 = vadd.f32 %v1064, %v1176
        %v1178 = vpop.f32.mrf.mxu0
        %v1179 = vadd.f32 %v1066, %v1178
        %v1180 = vpop.f32.mrf.mxu0
        %v1181 = vadd.f32 %v1068, %v1180
        %v1182 = vpop.f32.mrf.mxu0
        %v1183 = vadd.f32 %v1070, %v1182
        %1184 = vmatprep.mubr.bf16.mxu0 %v646
        %1185 = vmatmul.mubr.bf16.gmra.mxu0 %v645
        %v1186 = vpop.f32.mrf.mxu0
        %v1187 = vadd.f32 %v1074, %v1186
        %v1188 = vpop.f32.mrf.mxu0
        %v1189 = vadd.f32 %v1076, %v1188
        %v1190 = vpop.f32.mrf.mxu0
        %v1191 = vadd.f32 %v1078, %v1190
        %v1192 = vpop.f32.mrf.mxu0
        %v1193 = vadd.f32 %v1080, %v1192
        %1194 = vmatprep.mubr.bf16.mxu0 %v650
        %1195 = vmatmul.mubr.bf16.gmra.mxu0 %v649
        %v1196 = vpop.f32.mrf.mxu0
        %v1197 = vadd.f32 %v1084, %v1196
        %v1198 = vpop.f32.mrf.mxu0
        %v1199 = vadd.f32 %v1086, %v1198
        %v1200 = vpop.f32.mrf.mxu0
        %v1201 = vadd.f32 %v1088, %v1200
        %v1202 = vpop.f32.mrf.mxu0
        %v1203 = vadd.f32 %v1090, %v1202
        %1204 = vmatprep.mubr.bf16.mxu0 %v654
        %1205 = vmatmul.mubr.bf16.gmra.mxu0 %v653
        %v1206 = vpop.f32.mrf.mxu0
        %v1207 = vadd.f32 %v1094, %v1206
        %v1208 = vpop.f32.mrf.mxu0
        %v1209 = vadd.f32 %v1096, %v1208
        %v1210 = vpop.f32.mrf.mxu0
        %v1211 = vadd.f32 %v1098, %v1210
        %v1212 = vpop.f32.mrf.mxu0
        %v1213 = vadd.f32 %v1100, %v1212
        %1214 = vmatprep.mubr.bf16.mxu0 %v658
        %1215 = vmatmul.mubr.bf16.gmra.mxu0 %v657
        %v1216 = vpop.f32.mrf.mxu0
        %v1217 = vadd.f32 %v1104, %v1216
        %v1218 = vpop.f32.mrf.mxu0
        %v1219 = vadd.f32 %v1106, %v1218
        %v1220 = vpop.f32.mrf.mxu0
        %v1221 = vadd.f32 %v1108, %v1220
        %v1222 = vpop.f32.mrf.mxu0
        %v1223 = vadd.f32 %v1110, %v1222
        %1224 = vmatprep.mubr.bf16.mxu0 %v662
        %1225 = vmatmul.mubr.bf16.gmra.mxu0 %v661
        %v1226 = vpop.f32.mrf.mxu0
        %v1227 = vadd.f32 %v1114, %v1226
        %v1228 = vpop.f32.mrf.mxu0
        %v1229 = vadd.f32 %v1116, %v1228
        %v1230 = vpop.f32.mrf.mxu0
        %v1231 = vadd.f32 %v1118, %v1230
        %v1232 = vpop.f32.mrf.mxu0
        %v1233 = vadd.f32 %v1120, %v1232
        %1234 = vmatprep.mubr.bf16.mxu0 %v666
        %1235 = vmatmul.mubr.bf16.gmra.mxu0 %v665
        %v1236 = vpop.f32.mrf.mxu0
        %v1237 = vadd.f32 %v1124, %v1236
        %v1238 = vpop.f32.mrf.mxu0
        %v1239 = vadd.f32 %v1126, %v1238
        %v1240 = vpop.f32.mrf.mxu0
        %v1241 = vadd.f32 %v1128, %v1240
        %v1242 = vpop.f32.mrf.mxu0
        %v1243 = vadd.f32 %v1130, %v1242
        %1244 = vdwg.mxu0
        %v1245 = vadd.f32 %v411, %v1167
        %v1246 = vadd.f32 %v412, %v1169
        %v1247 = vadd.f32 %v413, %v1171
        %v1248 = vadd.f32 %v414, %v1173
        %v1249 = vadd.f32 %v415, %v1177
        %v1250 = vadd.f32 %v416, %v1179
        %v1251 = vadd.f32 %v417, %v1181
        %v1252 = vadd.f32 %v418, %v1183
        %v1253 = vadd.f32 %v419, %v1187
        %v1254 = vadd.f32 %v420, %v1189
        %v1255 = vadd.f32 %v421, %v1191
        %v1256 = vadd.f32 %v422, %v1193
        %v1257 = vadd.f32 %v423, %v1197
        %v1258 = vadd.f32 %v424, %v1199
        %v1259 = vadd.f32 %v425, %v1201
        %v1260 = vadd.f32 %v426, %v1203
        %v1261 = vadd.f32 %v427, %v1207
        %v1262 = vadd.f32 %v428, %v1209
        %v1263 = vadd.f32 %v429, %v1211
        %v1264 = vadd.f32 %v430, %v1213
        %v1265 = vadd.f32 %v431, %v1217
        %v1266 = vadd.f32 %v432, %v1219
        %v1267 = vadd.f32 %v433, %v1221
        %v1268 = vadd.f32 %v434, %v1223
        %v1269 = vadd.f32 %v435, %v1227
        %v1270 = vadd.f32 %v436, %v1229
        %v1271 = vadd.f32 %v437, %v1231
        %v1272 = vadd.f32 %v438, %v1233
        %v1273 = vadd.f32 %v439, %v1237
        %v1274 = vadd.f32 %v440, %v1239
        %v1275 = vadd.f32 %v441, %v1241
        %v1276 = vadd.f32 %v442, %v1243
        %1277 = vst [vmem:[%s410] sm:$0xff] %v1245
        %1278 = vst [vmem:[%s410 + $0x8] sm:$0xff] %v1246
        %1279 = vst [vmem:[%s410 + $0x10] sm:$0xff] %v1247
        %1280 = vst [vmem:[%s410 + $0x18] sm:$0xff] %v1248
        %1281 = vst [vmem:[%s410 + $0x20] sm:$0xff] %v1249
        %1282 = vst [vmem:[%s410 + $0x28] sm:$0xff] %v1250
        %1283 = vst [vmem:[%s410 + $0x30] sm:$0xff] %v1251
        %1284 = vst [vmem:[%s410 + $0x38] sm:$0xff] %v1252
        %1285 = vst [vmem:[%s410 + $0x40] sm:$0xff] %v1253
        %1286 = vst [vmem:[%s410 + $0x48] sm:$0xff] %v1254
        %1287 = vst [vmem:[%s410 + $0x50] sm:$0xff] %v1255
        %1288 = vst [vmem:[%s410 + $0x58] sm:$0xff] %v1256
        %1289 = vst [vmem:[%s410 + $0x60] sm:$0xff] %v1257
        %1290 = vst [vmem:[%s410 + $0x68] sm:$0xff] %v1258
        %1291 = vst [vmem:[%s410 + $0x70] sm:$0xff] %v1259
        %1292 = vst [vmem:[%s410 + $0x78] sm:$0xff] %v1260
        %1293 = vst [vmem:[%s410 + $0x80] sm:$0xff] %v1261
        %1294 = vst [vmem:[%s410 + $0x88] sm:$0xff] %v1262
        %1295 = vst [vmem:[%s410 + $0x90] sm:$0xff] %v1263
        %1296 = vst [vmem:[%s410 + $0x98] sm:$0xff] %v1264
        %1297 = vst [vmem:[%s410 + $0xa0] sm:$0xff] %v1265
        %1298 = vst [vmem:[%s410 + $0xa8] sm:$0xff] %v1266
        %1299 = vst [vmem:[%s410 + $0xb0] sm:$0xff] %v1267
        %1300 = vst [vmem:[%s410 + $0xb8] sm:$0xff] %v1268
        %1301 = vst [vmem:[%s410 + $0xc0] sm:$0xff] %v1269
        %1302 = vst [vmem:[%s410 + $0xc8] sm:$0xff] %v1270
        %1303 = vst [vmem:[%s410 + $0xd0] sm:$0xff] %v1271
        %1304 = vst [vmem:[%s410 + $0xd8] sm:$0xff] %v1272
        %1305 = vst [vmem:[%s410 + $0xe0] sm:$0xff] %v1273
        %1306 = vst [vmem:[%s410 + $0xe8] sm:$0xff] %v1274
        %1307 = vst [vmem:[%s410 + $0xf0] sm:$0xff] %v1275
        %1308 = vst [vmem:[%s410 + $0xf8] sm:$0xff] %v1276
        %p1309 = scmp.eq.s32.totalorder %s29, 1
        // Predicated region
        $region69: #{tpu_custom_call.1} parent=43 // pred_check
          %p1310 = pneg %p1309
        $region70: #{tpu_custom_call.1} parent=43 // pred_check_branch
          %1312 = sbr.rel (%p1310) target = $region72
        $region71: #{tpu_custom_call.1} parent=43 // pred_region
          %v1313 = vld [vmem:[%s410] sm:$0xff]
          %v1314 = vld [vmem:[%s410 + $0x8] sm:$0xff]
          %v1315 = vld [vmem:[%s410 + $0x10] sm:$0xff]
          %v1316 = vld [vmem:[%s410 + $0x18] sm:$0xff]
          %v1317 = vld [vmem:[%s410 + $0x20] sm:$0xff]
          %v1318 = vld [vmem:[%s410 + $0x28] sm:$0xff]
          %v1319 = vld [vmem:[%s410 + $0x30] sm:$0xff]
          %v1320 = vld [vmem:[%s410 + $0x38] sm:$0xff]
          %v1321 = vld [vmem:[%s410 + $0x40] sm:$0xff]
          %v1322 = vld [vmem:[%s410 + $0x48] sm:$0xff]
          %v1323 = vld [vmem:[%s410 + $0x50] sm:$0xff]
          %v1324 = vld [vmem:[%s410 + $0x58] sm:$0xff]
          %v1325 = vld [vmem:[%s410 + $0x60] sm:$0xff]
          %v1326 = vld [vmem:[%s410 + $0x68] sm:$0xff]
          %v1327 = vld [vmem:[%s410 + $0x70] sm:$0xff]
          %v1328 = vld [vmem:[%s410 + $0x78] sm:$0xff]
          %v1329 = vld [vmem:[%s410 + $0x80] sm:$0xff]
          %v1330 = vld [vmem:[%s410 + $0x88] sm:$0xff]
          %v1331 = vld [vmem:[%s410 + $0x90] sm:$0xff]
          %v1332 = vld [vmem:[%s410 + $0x98] sm:$0xff]
          %v1333 = vld [vmem:[%s410 + $0xa0] sm:$0xff]
          %v1334 = vld [vmem:[%s410 + $0xa8] sm:$0xff]
          %v1335 = vld [vmem:[%s410 + $0xb0] sm:$0xff]
          %v1336 = vld [vmem:[%s410 + $0xb8] sm:$0xff]
          %v1337 = vld [vmem:[%s410 + $0xc0] sm:$0xff]
          %v1338 = vld [vmem:[%s410 + $0xc8] sm:$0xff]
          %v1339 = vld [vmem:[%s410 + $0xd0] sm:$0xff]
          %v1340 = vld [vmem:[%s410 + $0xd8] sm:$0xff]
          %v1341 = vld [vmem:[%s410 + $0xe0] sm:$0xff]
          %v1342 = vld [vmem:[%s410 + $0xe8] sm:$0xff]
          %v1343 = vld [vmem:[%s410 + $0xf0] sm:$0xff]
          %v1344 = vld [vmem:[%s410 + $0xf8] sm:$0xff]
          %v1345 = vmax.f32 %v1313, 0.0
          %v1346 = vmax.f32 %v1314, 0.0
          %v1347 = vmax.f32 %v1315, 0.0
          %v1348 = vmax.f32 %v1316, 0.0
          %v1349 = vmax.f32 %v1317, 0.0
          %v1350 = vmax.f32 %v1318, 0.0
          %v1351 = vmax.f32 %v1319, 0.0
          %v1352 = vmax.f32 %v1320, 0.0
          %v1353 = vmax.f32 %v1321, 0.0
          %v1354 = vmax.f32 %v1322, 0.0
          %v1355 = vmax.f32 %v1323, 0.0
          %v1356 = vmax.f32 %v1324, 0.0
          %v1357 = vmax.f32 %v1325, 0.0
          %v1358 = vmax.f32 %v1326, 0.0
          %v1359 = vmax.f32 %v1327, 0.0
          %v1360 = vmax.f32 %v1328, 0.0
          %v1361 = vmax.f32 %v1329, 0.0
          %v1362 = vmax.f32 %v1330, 0.0
          %v1363 = vmax.f32 %v1331, 0.0
          %v1364 = vmax.f32 %v1332, 0.0
          %v1365 = vmax.f32 %v1333, 0.0
          %v1366 = vmax.f32 %v1334, 0.0
          %v1367 = vmax.f32 %v1335, 0.0
          %v1368 = vmax.f32 %v1336, 0.0
          %v1369 = vmax.f32 %v1337, 0.0
          %v1370 = vmax.f32 %v1338, 0.0
          %v1371 = vmax.f32 %v1339, 0.0
          %v1372 = vmax.f32 %v1340, 0.0
          %v1373 = vmax.f32 %v1341, 0.0
          %v1374 = vmax.f32 %v1342, 0.0
          %v1375 = vmax.f32 %v1343, 0.0
          %v1376 = vmax.f32 %v1344, 0.0
          %v1377 = vpack.c.bf16 %v1347, %v1345
          %v1378 = vpack.c.bf16 %v1348, %v1346
          %v1379 = vpack.c.bf16 %v1351, %v1349
          %v1380 = vpack.c.bf16 %v1352, %v1350
          %v1381 = vpack.c.bf16 %v1355, %v1353
          %v1382 = vpack.c.bf16 %v1356, %v1354
          %v1383 = vpack.c.bf16 %v1359, %v1357
          %v1384 = vpack.c.bf16 %v1360, %v1358
          %v1385 = vpack.c.bf16 %v1363, %v1361
          %v1386 = vpack.c.bf16 %v1364, %v1362
          %v1387 = vpack.c.bf16 %v1367, %v1365
          %v1388 = vpack.c.bf16 %v1368, %v1366
          %v1389 = vpack.c.bf16 %v1371, %v1369
          %v1390 = vpack.c.bf16 %v1372, %v1370
          %v1391 = vpack.c.bf16 %v1375, %v1373
          %v1392 = vpack.c.bf16 %v1376, %v1374
          %v1393 = vld [vmem:[#allocation8] sm:$0xf]
          %v1394 = vld [vmem:[#allocation8 + $0x4] sm:$0xf]
          %v1395 = vld [vmem:[#allocation8 + $0x8] sm:$0xf]
          %v1396 = vld [vmem:[#allocation8 + $0xc] sm:$0xf]
          %v1397 = vld [vmem:[#allocation8 + $0x10] sm:$0xf]
          %v1398 = vld [vmem:[#allocation8 + $0x14] sm:$0xf]
          %v1399 = vld [vmem:[#allocation8 + $0x18] sm:$0xf]
          %v1400 = vld [vmem:[#allocation8 + $0x1c] sm:$0xf]
          %v1401 = vld [vmem:[#allocation8 + $0x20] sm:$0xf]
          %v1402 = vld [vmem:[#allocation8 + $0x24] sm:$0xf]
          %v1403 = vld [vmem:[#allocation8 + $0x28] sm:$0xf]
          %v1404 = vld [vmem:[#allocation8 + $0x2c] sm:$0xf]
          %v1405 = vld [vmem:[#allocation8 + $0x30] sm:$0xf]
          %v1406 = vld [vmem:[#allocation8 + $0x34] sm:$0xf]
          %v1407 = vld [vmem:[#allocation8 + $0x38] sm:$0xf]
          %v1408 = vld [vmem:[#allocation8 + $0x3c] sm:$0xf]
          %v1409 = vld [vmem:[#allocation8 + $0x40] sm:$0xf]
          %v1410 = vld [vmem:[#allocation8 + $0x44] sm:$0xf]
          %v1411 = vld [vmem:[#allocation8 + $0x48] sm:$0xf]
          %v1412 = vld [vmem:[#allocation8 + $0x4c] sm:$0xf]
          %v1413 = vld [vmem:[#allocation8 + $0x50] sm:$0xf]
          %v1414 = vld [vmem:[#allocation8 + $0x54] sm:$0xf]
          %v1415 = vld [vmem:[#allocation8 + $0x58] sm:$0xf]
          %v1416 = vld [vmem:[#allocation8 + $0x5c] sm:$0xf]
          %v1417 = vld [vmem:[#allocation8 + $0x60] sm:$0xf]
          %v1418 = vld [vmem:[#allocation8 + $0x64] sm:$0xf]
          %v1419 = vld [vmem:[#allocation8 + $0x68] sm:$0xf]
          %v1420 = vld [vmem:[#allocation8 + $0x6c] sm:$0xf]
          %v1421 = vld [vmem:[#allocation8 + $0x70] sm:$0xf]
          %v1422 = vld [vmem:[#allocation8 + $0x74] sm:$0xf]
          %v1423 = vld [vmem:[#allocation8 + $0x78] sm:$0xf]
          %v1424 = vld [vmem:[#allocation8 + $0x7c] sm:$0xf]
          %v1457 = vunpack.c.l.b16 %v1393
          %v1458 = vunpack.c.l.b16 %v1394
          %v1459 = vunpack.c.l.b16 %v1395
          %v1460 = vunpack.c.l.b16 %v1396
          %v1461 = vunpack.c.l.b16 %v1397
          %v1462 = vunpack.c.l.b16 %v1398
          %v1463 = vunpack.c.l.b16 %v1399
          %v1464 = vunpack.c.l.b16 %v1400
          %v1465 = vunpack.c.l.b16 %v1401
          %v1466 = vunpack.c.l.b16 %v1402
          %v1467 = vunpack.c.l.b16 %v1403
          %v1468 = vunpack.c.l.b16 %v1404
          %v1469 = vunpack.c.l.b16 %v1405
          %v1470 = vunpack.c.l.b16 %v1406
          %v1471 = vunpack.c.l.b16 %v1407
          %v1472 = vunpack.c.l.b16 %v1408
          %v1473 = vunpack.c.l.b16 %v1409
          %v1474 = vunpack.c.l.b16 %v1410
          %v1475 = vunpack.c.l.b16 %v1411
          %v1476 = vunpack.c.l.b16 %v1412
          %v1477 = vunpack.c.l.b16 %v1413
          %v1478 = vunpack.c.l.b16 %v1414
          %v1479 = vunpack.c.l.b16 %v1415
          %v1480 = vunpack.c.l.b16 %v1416
          %v1481 = vunpack.c.l.b16 %v1417
          %v1482 = vunpack.c.l.b16 %v1418
          %v1483 = vunpack.c.l.b16 %v1419
          %v1484 = vunpack.c.l.b16 %v1420
          %v1485 = vunpack.c.l.b16 %v1421
          %v1486 = vunpack.c.l.b16 %v1422
          %v1487 = vunpack.c.l.b16 %v1423
          %v1488 = vunpack.c.l.b16 %v1424
          %v1489 = vpack.c.b16 %v1458, %v1457
          %v1490 = vpack.c.b16 %v1460, %v1459
          %v1491 = vpack.c.b16 %v1462, %v1461
          %v1492 = vpack.c.b16 %v1464, %v1463
          %v1493 = vpack.c.b16 %v1466, %v1465
          %v1494 = vpack.c.b16 %v1468, %v1467
          %v1495 = vpack.c.b16 %v1470, %v1469
          %v1496 = vpack.c.b16 %v1472, %v1471
          %v1497 = vpack.c.b16 %v1474, %v1473
          %v1498 = vpack.c.b16 %v1476, %v1475
          %v1499 = vpack.c.b16 %v1478, %v1477
          %v1500 = vpack.c.b16 %v1480, %v1479
          %v1501 = vpack.c.b16 %v1482, %v1481
          %v1502 = vpack.c.b16 %v1484, %v1483
          %v1503 = vpack.c.b16 %v1486, %v1485
          %v1504 = vpack.c.b16 %v1488, %v1487
          %1521 = vmatprep.subr.bf16.mxu0 0
          %1522 = vmatpush1.bf16.msra.mxu0 %v1496
          %1523 = vmatprep.subr.bf16.mxu0 0
          %1524 = vmatpush1.bf16.msra.mxu0 %v1495
          %1525 = vmatprep.subr.bf16.mxu0 0
          %1526 = vmatpush1.bf16.msra.mxu0 %v1494
          %1527 = vmatprep.subr.bf16.mxu0 0
          %1528 = vmatpush1.bf16.msra.mxu0 %v1493
          %1529 = vmatprep.subr.bf16.mxu0 0
          %1530 = vmatpush1.bf16.msra.mxu0 %v1492
          %1531 = vmatprep.subr.bf16.mxu0 0
          %1532 = vmatpush1.bf16.msra.mxu0 %v1491
          %1533 = vmatprep.subr.bf16.mxu0 0
          %1534 = vmatpush1.bf16.msra.mxu0 %v1490
          %1535 = vmatprep.subr.bf16.mxu0 0
          %1536 = vmatpush1.bf16.msra.mxu0 %v1489
          %1537 = vmatprep.subr.bf16.mxu0 0
          %1538 = vmatpush2.bf16.msra.mxu0 %v1504
          %1539 = vmatprep.subr.bf16.mxu0 0
          %1540 = vmatpush2.bf16.msra.mxu0 %v1503
          %1541 = vmatprep.subr.bf16.mxu0 0
          %1542 = vmatpush2.bf16.msra.mxu0 %v1502
          %1543 = vmatprep.subr.bf16.mxu0 0
          %1544 = vmatpush2.bf16.msra.mxu0 %v1501
          %1545 = vmatprep.subr.bf16.mxu0 0
          %1546 = vmatpush2.bf16.msra.mxu0 %v1500
          %1547 = vmatprep.subr.bf16.mxu0 0
          %1548 = vmatpush2.bf16.msra.mxu0 %v1499
          %1549 = vmatprep.subr.bf16.mxu0 0
          %1550 = vmatpush2.bf16.msra.mxu0 %v1498
          %1551 = vmatprep.subr.bf16.mxu0 0
          %1552 = vmatpush2.bf16.msra.mxu0 %v1497
          %1553 = vmatprep.mubr.bf16.mxu0 %v1378
          %1554 = vmatmul.mubr.bf16.gmra.mxu0 %v1377
          %v1555 = vpop.f32.mrf.mxu0
          %v1556 = vadd.f32 0.0, %v1555
          %v1557 = vpop.f32.mrf.mxu0
          %v1558 = vpop.f32.mrf.mxu0
          %v1559 = vadd.f32 0.0, %v1558
          %v1560 = vpop.f32.mrf.mxu0
          %1561 = vmatprep.mubr.bf16.mxu0 %v1380
          %1562 = vmatmul.mubr.bf16.gmra.mxu0 %v1379
          %v1563 = vpop.f32.mrf.mxu0
          %v1564 = vadd.f32 0.0, %v1563
          %v1565 = vpop.f32.mrf.mxu0
          %v1566 = vpop.f32.mrf.mxu0
          %v1567 = vadd.f32 0.0, %v1566
          %v1568 = vpop.f32.mrf.mxu0
          %1569 = vmatprep.mubr.bf16.mxu0 %v1382
          %1570 = vmatmul.mubr.bf16.gmra.mxu0 %v1381
          %v1571 = vpop.f32.mrf.mxu0
          %v1572 = vadd.f32 0.0, %v1571
          %v1573 = vpop.f32.mrf.mxu0
          %v1574 = vpop.f32.mrf.mxu0
          %v1575 = vadd.f32 0.0, %v1574
          %v1576 = vpop.f32.mrf.mxu0
          %1577 = vmatprep.mubr.bf16.mxu0 %v1384
          %1578 = vmatmul.mubr.bf16.gmra.mxu0 %v1383
          %v1579 = vpop.f32.mrf.mxu0
          %v1580 = vadd.f32 0.0, %v1579
          %v1581 = vpop.f32.mrf.mxu0
          %v1582 = vpop.f32.mrf.mxu0
          %v1583 = vadd.f32 0.0, %v1582
          %v1584 = vpop.f32.mrf.mxu0
          %1585 = vmatprep.mubr.bf16.mxu0 %v1386
          %1586 = vmatmul.mubr.bf16.gmra.mxu0 %v1385
          %v1587 = vpop.f32.mrf.mxu0
          %v1588 = vadd.f32 0.0, %v1587
          %v1589 = vpop.f32.mrf.mxu0
          %v1590 = vpop.f32.mrf.mxu0
          %v1591 = vadd.f32 0.0, %v1590
          %v1592 = vpop.f32.mrf.mxu0
          %1593 = vmatprep.mubr.bf16.mxu0 %v1388
          %1594 = vmatmul.mubr.bf16.gmra.mxu0 %v1387
          %v1595 = vpop.f32.mrf.mxu0
          %v1596 = vadd.f32 0.0, %v1595
          %v1597 = vpop.f32.mrf.mxu0
          %v1598 = vpop.f32.mrf.mxu0
          %v1599 = vadd.f32 0.0, %v1598
          %v1600 = vpop.f32.mrf.mxu0
          %1601 = vmatprep.mubr.bf16.mxu0 %v1390
          %1602 = vmatmul.mubr.bf16.gmra.mxu0 %v1389
          %v1603 = vpop.f32.mrf.mxu0
          %v1604 = vadd.f32 0.0, %v1603
          %v1605 = vpop.f32.mrf.mxu0
          %v1606 = vpop.f32.mrf.mxu0
          %v1607 = vadd.f32 0.0, %v1606
          %v1608 = vpop.f32.mrf.mxu0
          %1609 = vmatprep.mubr.bf16.mxu0 %v1392
          %1610 = vmatmul.mubr.bf16.gmra.mxu0 %v1391
          %v1611 = vpop.f32.mrf.mxu0
          %v1612 = vadd.f32 0.0, %v1611
          %v1613 = vpop.f32.mrf.mxu0
          %v1614 = vpop.f32.mrf.mxu0
          %v1615 = vadd.f32 0.0, %v1614
          %v1616 = vpop.f32.mrf.mxu0
          %1617 = vdwg.mxu0
          %v1618 = vmul.f32 %v1556, %v1556
          %v1619 = vmul.f32 %v1559, %v1559
          %v1620 = vmul.f32 %v1564, %v1564
          %v1621 = vmul.f32 %v1567, %v1567
          %v1622 = vmul.f32 %v1572, %v1572
          %v1623 = vmul.f32 %v1575, %v1575
          %v1624 = vmul.f32 %v1580, %v1580
          %v1625 = vmul.f32 %v1583, %v1583
          %v1626 = vmul.f32 %v1588, %v1588
          %v1627 = vmul.f32 %v1591, %v1591
          %v1628 = vmul.f32 %v1596, %v1596
          %v1629 = vmul.f32 %v1599, %v1599
          %v1630 = vmul.f32 %v1604, %v1604
          %v1631 = vmul.f32 %v1607, %v1607
          %v1632 = vmul.f32 %v1612, %v1612
          %v1633 = vmul.f32 %v1615, %v1615
          %1634 = vadd.xlane.f32.xlu0 %v1618
          %v1635 = vpop.xlane.xlu0 %1634
          %1636 = vadd.xlane.f32.xlu0 %v1619
          %v1637 = vpop.xlane.xlu0 %1636
          %1638 = vadd.xlane.f32.xlu0 %v1620
          %v1639 = vpop.xlane.xlu0 %1638
          %1640 = vadd.xlane.f32.xlu0 %v1621
          %v1641 = vpop.xlane.xlu0 %1640
          %1642 = vadd.xlane.f32.xlu0 %v1622
          %v1643 = vpop.xlane.xlu0 %1642
          %1644 = vadd.xlane.f32.xlu0 %v1623
          %v1645 = vpop.xlane.xlu0 %1644
          %1646 = vadd.xlane.f32.xlu0 %v1624
          %v1647 = vpop.xlane.xlu0 %1646
          %1648 = vadd.xlane.f32.xlu0 %v1625
          %v1649 = vpop.xlane.xlu0 %1648
          %1650 = vadd.xlane.f32.xlu0 %v1626
          %v1651 = vpop.xlane.xlu0 %1650
          %1652 = vadd.xlane.f32.xlu0 %v1627
          %v1653 = vpop.xlane.xlu0 %1652
          %1654 = vadd.xlane.f32.xlu0 %v1628
          %v1655 = vpop.xlane.xlu0 %1654
          %1656 = vadd.xlane.f32.xlu0 %v1629
          %v1657 = vpop.xlane.xlu0 %1656
          %1658 = vadd.xlane.f32.xlu0 %v1630
          %v1659 = vpop.xlane.xlu0 %1658
          %1660 = vadd.xlane.f32.xlu0 %v1631
          %v1661 = vpop.xlane.xlu0 %1660
          %1662 = vadd.xlane.f32.xlu0 %v1632
          %v1663 = vpop.xlane.xlu0 %1662
          %1664 = vadd.xlane.f32.xlu0 %v1633
          %v1665 = vpop.xlane.xlu0 %1664
          %v1666 = vadd.f32 %v1635, 1e-12
          %v1667 = vadd.f32 %v1637, 1e-12
          %v1668 = vadd.f32 %v1639, 1e-12
          %v1669 = vadd.f32 %v1641, 1e-12
          %v1670 = vadd.f32 %v1643, 1e-12
          %v1671 = vadd.f32 %v1645, 1e-12
          %v1672 = vadd.f32 %v1647, 1e-12
          %v1673 = vadd.f32 %v1649, 1e-12
          %v1674 = vadd.f32 %v1651, 1e-12
          %v1675 = vadd.f32 %v1653, 1e-12
          %v1676 = vadd.f32 %v1655, 1e-12
          %v1677 = vadd.f32 %v1657, 1e-12
          %v1678 = vadd.f32 %v1659, 1e-12
          %v1679 = vadd.f32 %v1661, 1e-12
          %v1680 = vadd.f32 %v1663, 1e-12
          %v1681 = vadd.f32 %v1665, 1e-12
          %v1682 = vrsqrt.pop %v1666
          %v1683 = vrsqrt.pop %v1667
          %v1684 = vrsqrt.pop %v1668
          %v1685 = vrsqrt.pop %v1669
          %v1686 = vrsqrt.pop %v1670
          %v1687 = vrsqrt.pop %v1671
          %v1688 = vrsqrt.pop %v1672
          %v1689 = vrsqrt.pop %v1673
          %v1690 = vrsqrt.pop %v1674
          %v1691 = vrsqrt.pop %v1675
          %v1692 = vrsqrt.pop %v1676
          %v1693 = vrsqrt.pop %v1677
          %v1694 = vrsqrt.pop %v1678
          %v1695 = vrsqrt.pop %v1679
          %v1696 = vrsqrt.pop %v1680
          %v1697 = vrsqrt.pop %v1681
          %v1698 = vmul.f32 %v1556, %v1682
          %v1699 = vmul.f32 %v1559, %v1683
          %v1700 = vmul.f32 %v1564, %v1684
          %v1701 = vmul.f32 %v1567, %v1685
          %v1702 = vmul.f32 %v1572, %v1686
          %v1703 = vmul.f32 %v1575, %v1687
          %v1704 = vmul.f32 %v1580, %v1688
          %v1705 = vmul.f32 %v1583, %v1689
          %v1706 = vmul.f32 %v1588, %v1690
          %v1707 = vmul.f32 %v1591, %v1691
          %v1708 = vmul.f32 %v1596, %v1692
          %v1709 = vmul.f32 %v1599, %v1693
          %v1710 = vmul.f32 %v1604, %v1694
          %v1711 = vmul.f32 %v1607, %v1695
          %v1712 = vmul.f32 %v1612, %v1696
          %v1713 = vmul.f32 %v1615, %v1697
          %v1714 = vpack.c.bf16 %v1699, %v1698
          %v1715 = vpack.c.bf16 %v1701, %v1700
          %v1716 = vpack.c.bf16 %v1703, %v1702
          %v1717 = vpack.c.bf16 %v1705, %v1704
          %v1718 = vpack.c.bf16 %v1707, %v1706
          %v1719 = vpack.c.bf16 %v1709, %v1708
          %v1720 = vpack.c.bf16 %v1711, %v1710
          %v1721 = vpack.c.bf16 %v1713, %v1712
          %v1722 = vld [vmem:[#allocation9] sm:$0xf]
          %v1723 = vld [vmem:[#allocation9 + $0x4] sm:$0xf]
          %v1724 = vld [vmem:[#allocation9 + $0x8] sm:$0xf]
          %v1725 = vld [vmem:[#allocation9 + $0xc] sm:$0xf]
          %v1726 = vld [vmem:[#allocation9 + $0x10] sm:$0xf]
          %v1727 = vld [vmem:[#allocation9 + $0x14] sm:$0xf]
          %v1728 = vld [vmem:[#allocation9 + $0x18] sm:$0xf]
          %v1729 = vld [vmem:[#allocation9 + $0x1c] sm:$0xf]
          %v1730 = vld [vmem:[#allocation9 + $0x20] sm:$0xf]
          %v1731 = vld [vmem:[#allocation9 + $0x24] sm:$0xf]
          %v1732 = vld [vmem:[#allocation9 + $0x28] sm:$0xf]
          %v1733 = vld [vmem:[#allocation9 + $0x2c] sm:$0xf]
          %v1734 = vld [vmem:[#allocation9 + $0x30] sm:$0xf]
          %v1735 = vld [vmem:[#allocation9 + $0x34] sm:$0xf]
          %v1736 = vld [vmem:[#allocation9 + $0x38] sm:$0xf]
          %v1737 = vld [vmem:[#allocation9 + $0x3c] sm:$0xf]
          %v1754 = vunpack.c.l.b16 %v1722
          %v1755 = vunpack.c.l.b16 %v1723
          %v1756 = vunpack.c.l.b16 %v1724
          %v1757 = vunpack.c.l.b16 %v1725
          %v1758 = vunpack.c.l.b16 %v1726
          %v1759 = vunpack.c.l.b16 %v1727
          %v1760 = vunpack.c.l.b16 %v1728
          %v1761 = vunpack.c.l.b16 %v1729
          %v1762 = vunpack.c.l.b16 %v1730
          %v1763 = vunpack.c.l.b16 %v1731
          %v1764 = vunpack.c.l.b16 %v1732
          %v1765 = vunpack.c.l.b16 %v1733
          %v1766 = vunpack.c.l.b16 %v1734
          %v1767 = vunpack.c.l.b16 %v1735
          %v1768 = vunpack.c.l.b16 %v1736
          %v1769 = vunpack.c.l.b16 %v1737
          %v1770 = vpack.c.b16 %v1755, %v1754
          %v1771 = vpack.c.b16 %v1757, %v1756
          %v1772 = vpack.c.b16 %v1759, %v1758
          %v1773 = vpack.c.b16 %v1761, %v1760
          %v1774 = vpack.c.b16 %v1763, %v1762
          %v1775 = vpack.c.b16 %v1765, %v1764
          %v1776 = vpack.c.b16 %v1767, %v1766
          %v1777 = vpack.c.b16 %v1769, %v1768
          %1786 = vmatprep.subr.bf16.mxu0 0
          %1787 = vmatpush1.bf16.msra.mxu0 %v1777
          %1788 = vmatprep.subr.bf16.mxu0 0
          %1789 = vmatpush1.bf16.msra.mxu0 %v1776
          %1790 = vmatprep.subr.bf16.mxu0 0
          %1791 = vmatpush1.bf16.msra.mxu0 %v1775
          %1792 = vmatprep.subr.bf16.mxu0 0
          %1793 = vmatpush1.bf16.msra.mxu0 %v1774
          %1794 = vmatprep.subr.bf16.mxu0 0
          %1795 = vmatpush1.bf16.msra.mxu0 %v1773
          %1796 = vmatprep.subr.bf16.mxu0 0
          %1797 = vmatpush1.bf16.msra.mxu0 %v1772
          %1798 = vmatprep.subr.bf16.mxu0 0
          %1799 = vmatpush1.bf16.msra.mxu0 %v1771
          %1800 = vmatprep.subr.bf16.mxu0 0
          %1801 = vmatpush1.bf16.msra.mxu0 %v1770
          %1802 = vmatprep.subr.bf16.mxu0 0
          %1803 = vmatpush2.bf16.msra.mxu0 0
          %1804 = vmatprep.subr.bf16.mxu0 0
          %1805 = vmatpush2.bf16.msra.mxu0 0
          %1806 = vmatprep.subr.bf16.mxu0 0
          %1807 = vmatpush2.bf16.msra.mxu0 0
          %1808 = vmatprep.subr.bf16.mxu0 0
          %1809 = vmatpush2.bf16.msra.mxu0 0
          %1810 = vmatprep.subr.bf16.mxu0 0
          %1811 = vmatpush2.bf16.msra.mxu0 0
          %1812 = vmatprep.subr.bf16.mxu0 0
          %1813 = vmatpush2.bf16.msra.mxu0 0
          %1814 = vmatprep.subr.bf16.mxu0 0
          %1815 = vmatpush2.bf16.msra.mxu0 0
          %1816 = vmatprep.subr.bf16.mxu0 0
          %1817 = vmatpush2.bf16.msra.mxu0 0
          %1818 = vmatprep.mubr.bf16.mxu0 0
          %1819 = vmatmul.mubr.bf16.gmra.mxu0 %v1714
          %v1820 = vpop.f32.mrf.mxu0
          %v1821 = vadd.f32 0.0, %v1820
          %v1822 = vpop.f32.mrf.mxu0
          %v1823 = vpop.f32.mrf.mxu0
          %v1824 = vadd.f32 0.0, %v1823
          %v1825 = vpop.f32.mrf.mxu0
          %1826 = vmatprep.mubr.bf16.mxu0 0
          %1827 = vmatmul.mubr.bf16.gmra.mxu0 %v1715
          %v1828 = vpop.f32.mrf.mxu0
          %v1829 = vadd.f32 0.0, %v1828
          %v1830 = vpop.f32.mrf.mxu0
          %v1831 = vpop.f32.mrf.mxu0
          %v1832 = vadd.f32 0.0, %v1831
          %v1833 = vpop.f32.mrf.mxu0
          %1834 = vmatprep.mubr.bf16.mxu0 0
          %1835 = vmatmul.mubr.bf16.gmra.mxu0 %v1716
          %v1836 = vpop.f32.mrf.mxu0
          %v1837 = vadd.f32 0.0, %v1836
          %v1838 = vpop.f32.mrf.mxu0
          %v1839 = vpop.f32.mrf.mxu0
          %v1840 = vadd.f32 0.0, %v1839
          %v1841 = vpop.f32.mrf.mxu0
          %1842 = vmatprep.mubr.bf16.mxu0 0
          %1843 = vmatmul.mubr.bf16.gmra.mxu0 %v1717
          %v1844 = vpop.f32.mrf.mxu0
          %v1845 = vadd.f32 0.0, %v1844
          %v1846 = vpop.f32.mrf.mxu0
          %v1847 = vpop.f32.mrf.mxu0
          %v1848 = vadd.f32 0.0, %v1847
          %v1849 = vpop.f32.mrf.mxu0
          %1850 = vmatprep.mubr.bf16.mxu0 0
          %1851 = vmatmul.mubr.bf16.gmra.mxu0 %v1718
          %v1852 = vpop.f32.mrf.mxu0
          %v1853 = vadd.f32 0.0, %v1852
          %v1854 = vpop.f32.mrf.mxu0
          %v1855 = vpop.f32.mrf.mxu0
          %v1856 = vadd.f32 0.0, %v1855
          %v1857 = vpop.f32.mrf.mxu0
          %1858 = vmatprep.mubr.bf16.mxu0 0
          %1859 = vmatmul.mubr.bf16.gmra.mxu0 %v1719
          %v1860 = vpop.f32.mrf.mxu0
          %v1861 = vadd.f32 0.0, %v1860
          %v1862 = vpop.f32.mrf.mxu0
          %v1863 = vpop.f32.mrf.mxu0
          %v1864 = vadd.f32 0.0, %v1863
          %v1865 = vpop.f32.mrf.mxu0
          %1866 = vmatprep.mubr.bf16.mxu0 0
          %1867 = vmatmul.mubr.bf16.gmra.mxu0 %v1720
          %v1868 = vpop.f32.mrf.mxu0
          %v1869 = vadd.f32 0.0, %v1868
          %v1870 = vpop.f32.mrf.mxu0
          %v1871 = vpop.f32.mrf.mxu0
          %v1872 = vadd.f32 0.0, %v1871
          %v1873 = vpop.f32.mrf.mxu0
          %1874 = vmatprep.mubr.bf16.mxu0 0
          %1875 = vmatmul.mubr.bf16.gmra.mxu0 %v1721
          %v1876 = vpop.f32.mrf.mxu0
          %v1877 = vadd.f32 0.0, %v1876
          %v1878 = vpop.f32.mrf.mxu0
          %v1879 = vpop.f32.mrf.mxu0
          %v1880 = vadd.f32 0.0, %v1879
          %v1881 = vpop.f32.mrf.mxu0
          %1882 = vdwg.mxu0
          %v1883 = vpack.c.bf16 %v1824, %v1821
          %v1884 = vpack.c.bf16 %v1832, %v1829
          %v1885 = vpack.c.bf16 %v1840, %v1837
          %v1886 = vpack.c.bf16 %v1848, %v1845
          %v1887 = vpack.c.bf16 %v1856, %v1853
          %v1888 = vpack.c.bf16 %v1864, %v1861
          %v1889 = vpack.c.bf16 %v1872, %v1869
          %v1890 = vpack.c.bf16 %v1880, %v1877
          %v1891 = vld [vmem:[#allocation11] sm:$0xf]
          %v1892 = vld [vmem:[#allocation11 + $0x4] sm:$0xf]
          %v1893 = vld [vmem:[#allocation11 + $0x8] sm:$0xf]
          %v1894 = vld [vmem:[#allocation11 + $0xc] sm:$0xf]
          %v1895 = vld [vmem:[#allocation11 + $0x10] sm:$0xf]
          %v1896 = vld [vmem:[#allocation11 + $0x14] sm:$0xf]
          %v1897 = vld [vmem:[#allocation11 + $0x18] sm:$0xf]
          %v1898 = vld [vmem:[#allocation11 + $0x1c] sm:$0xf]
          %v1899 = vld [vmem:[#allocation11 + $0x20] sm:$0xf]
          %v1900 = vld [vmem:[#allocation11 + $0x24] sm:$0xf]
          %v1901 = vld [vmem:[#allocation11 + $0x28] sm:$0xf]
          %v1902 = vld [vmem:[#allocation11 + $0x2c] sm:$0xf]
          %v1903 = vld [vmem:[#allocation11 + $0x30] sm:$0xf]
          %v1904 = vld [vmem:[#allocation11 + $0x34] sm:$0xf]
          %v1905 = vld [vmem:[#allocation11 + $0x38] sm:$0xf]
          %v1906 = vld [vmem:[#allocation11 + $0x3c] sm:$0xf]
          %v1907 = vld [vmem:[%s5] sm:$0x1]
          %v1909 = vlaneseq
          %v1910 = vshrl.u32 %v1909, 7
          %v1911 = vsub.s32 0, %v1910
          %v1912 = vrot.slane %v1907, %v1911
          %v1930 = vunpack.c.l.b16 %v1891
          %v1931 = vunpack.c.l.b16 %v1892
          %v1932 = vunpack.c.l.b16 %v1893
          %v1933 = vunpack.c.l.b16 %v1894
          %v1934 = vunpack.c.l.b16 %v1895
          %v1935 = vunpack.c.l.b16 %v1896
          %v1936 = vunpack.c.l.b16 %v1897
          %v1937 = vunpack.c.l.b16 %v1898
          %v1938 = vunpack.c.l.b16 %v1899
          %v1939 = vunpack.c.l.b16 %v1900
          %v1940 = vunpack.c.l.b16 %v1901
          %v1941 = vunpack.c.l.b16 %v1902
          %v1942 = vunpack.c.l.b16 %v1903
          %v1943 = vunpack.c.l.b16 %v1904
          %v1944 = vunpack.c.l.b16 %v1905
          %v1945 = vunpack.c.l.b16 %v1906
          %v1946 = vpack.c.b16 %v1931, %v1930
          %v1947 = vpack.c.b16 %v1933, %v1932
          %v1948 = vpack.c.b16 %v1935, %v1934
          %v1949 = vpack.c.b16 %v1937, %v1936
          %v1950 = vpack.c.b16 %v1939, %v1938
          %v1951 = vpack.c.b16 %v1941, %v1940
          %v1952 = vpack.c.b16 %v1943, %v1942
          %v1953 = vpack.c.b16 %v1945, %v1944
          %1962 = vmatprep.subr.bf16.mxu0 0
          %1963 = vmatpush1.bf16.msra.mxu0 %v1953
          %1964 = vmatprep.subr.bf16.mxu0 0
          %1965 = vmatpush1.bf16.msra.mxu0 %v1952
          %1966 = vmatprep.subr.bf16.mxu0 0
          %1967 = vmatpush1.bf16.msra.mxu0 %v1951
          %1968 = vmatprep.subr.bf16.mxu0 0
          %1969 = vmatpush1.bf16.msra.mxu0 %v1950
          %1970 = vmatprep.subr.bf16.mxu0 0
          %1971 = vmatpush1.bf16.msra.mxu0 %v1949
          %1972 = vmatprep.subr.bf16.mxu0 0
          %1973 = vmatpush1.bf16.msra.mxu0 %v1948
          %1974 = vmatprep.subr.bf16.mxu0 0
          %1975 = vmatpush1.bf16.msra.mxu0 %v1947
          %1976 = vmatprep.subr.bf16.mxu0 0
          %1977 = vmatpush1.bf16.msra.mxu0 %v1946
          %1978 = vmatprep.subr.bf16.mxu0 0
          %1979 = vmatpush2.bf16.msra.mxu0 0
          %1980 = vmatprep.subr.bf16.mxu0 0
          %1981 = vmatpush2.bf16.msra.mxu0 0
          %1982 = vmatprep.subr.bf16.mxu0 0
          %1983 = vmatpush2.bf16.msra.mxu0 0
          %1984 = vmatprep.subr.bf16.mxu0 0
          %1985 = vmatpush2.bf16.msra.mxu0 0
          %1986 = vmatprep.subr.bf16.mxu0 0
          %1987 = vmatpush2.bf16.msra.mxu0 0
          %1988 = vmatprep.subr.bf16.mxu0 0
          %1989 = vmatpush2.bf16.msra.mxu0 0
          %1990 = vmatprep.subr.bf16.mxu0 0
          %1991 = vmatpush2.bf16.msra.mxu0 0
          %1992 = vmatprep.subr.bf16.mxu0 0
          %1993 = vmatpush2.bf16.msra.mxu0 0
          %1994 = vmatprep.mubr.bf16.mxu0 0
          %1995 = vmatmul.mubr.bf16.gmra.mxu0 %v1883
          %v1996 = vpop.f32.mrf.mxu0
          %v1997 = vadd.f32 %v1912, %v1996
          %v1998 = vpop.f32.mrf.mxu0
          %v1999 = vpop.f32.mrf.mxu0
          %v2000 = vadd.f32 %v1912, %v1999
          %v2001 = vpop.f32.mrf.mxu0
          %2002 = vmatprep.mubr.bf16.mxu0 0
          %2003 = vmatmul.mubr.bf16.gmra.mxu0 %v1884
          %v2004 = vpop.f32.mrf.mxu0
          %v2005 = vadd.f32 %v1912, %v2004
          %v2006 = vpop.f32.mrf.mxu0
          %v2007 = vpop.f32.mrf.mxu0
          %v2008 = vadd.f32 %v1912, %v2007
          %v2009 = vpop.f32.mrf.mxu0
          %2010 = vmatprep.mubr.bf16.mxu0 0
          %2011 = vmatmul.mubr.bf16.gmra.mxu0 %v1885
          %v2012 = vpop.f32.mrf.mxu0
          %v2013 = vadd.f32 %v1912, %v2012
          %v2014 = vpop.f32.mrf.mxu0
          %v2015 = vpop.f32.mrf.mxu0
          %v2016 = vadd.f32 %v1912, %v2015
          %v2017 = vpop.f32.mrf.mxu0
          %2018 = vmatprep.mubr.bf16.mxu0 0
          %2019 = vmatmul.mubr.bf16.gmra.mxu0 %v1886
          %v2020 = vpop.f32.mrf.mxu0
          %v2021 = vadd.f32 %v1912, %v2020
          %v2022 = vpop.f32.mrf.mxu0
          %v2023 = vpop.f32.mrf.mxu0
          %v2024 = vadd.f32 %v1912, %v2023
          %v2025 = vpop.f32.mrf.mxu0
          %2026 = vmatprep.mubr.bf16.mxu0 0
          %2027 = vmatmul.mubr.bf16.gmra.mxu0 %v1887
          %v2028 = vpop.f32.mrf.mxu0
          %v2029 = vadd.f32 %v1912, %v2028
          %v2030 = vpop.f32.mrf.mxu0
          %v2031 = vpop.f32.mrf.mxu0
          %v2032 = vadd.f32 %v1912, %v2031
          %v2033 = vpop.f32.mrf.mxu0
          %2034 = vmatprep.mubr.bf16.mxu0 0
          %2035 = vmatmul.mubr.bf16.gmra.mxu0 %v1888
          %v2036 = vpop.f32.mrf.mxu0
          %v2037 = vadd.f32 %v1912, %v2036
          %v2038 = vpop.f32.mrf.mxu0
          %v2039 = vpop.f32.mrf.mxu0
          %v2040 = vadd.f32 %v1912, %v2039
          %v2041 = vpop.f32.mrf.mxu0
          %2042 = vmatprep.mubr.bf16.mxu0 0
          %2043 = vmatmul.mubr.bf16.gmra.mxu0 %v1889
          %v2044 = vpop.f32.mrf.mxu0
          %v2045 = vadd.f32 %v1912, %v2044
          %v2046 = vpop.f32.mrf.mxu0
          %v2047 = vpop.f32.mrf.mxu0
          %v2048 = vadd.f32 %v1912, %v2047
          %v2049 = vpop.f32.mrf.mxu0
          %2050 = vmatprep.mubr.bf16.mxu0 0
          %2051 = vmatmul.mubr.bf16.gmra.mxu0 %v1890
          %v2052 = vpop.f32.mrf.mxu0
          %v2053 = vadd.f32 %v1912, %v2052
          %v2054 = vpop.f32.mrf.mxu0
          %v2055 = vpop.f32.mrf.mxu0
          %v2056 = vadd.f32 %v1912, %v2055
          %v2057 = vpop.f32.mrf.mxu0
          %2058 = vdwg.mxu0
          %2059 = vst [vmem:[#allocation12] sm:$0xff] %v1997
          %2060 = vst [vmem:[#allocation12 + $0x8] sm:$0xff] %v2000
          %2061 = vst [vmem:[#allocation12 + $0x10] sm:$0xff] %v2005
          %2062 = vst [vmem:[#allocation12 + $0x18] sm:$0xff] %v2008
          %2063 = vst [vmem:[#allocation12 + $0x20] sm:$0xff] %v2013
          %2064 = vst [vmem:[#allocation12 + $0x28] sm:$0xff] %v2016
          %2065 = vst [vmem:[#allocation12 + $0x30] sm:$0xff] %v2021
          %2066 = vst [vmem:[#allocation12 + $0x38] sm:$0xff] %v2024
          %2067 = vst [vmem:[#allocation12 + $0x40] sm:$0xff] %v2029
          %2068 = vst [vmem:[#allocation12 + $0x48] sm:$0xff] %v2032
          %2069 = vst [vmem:[#allocation12 + $0x50] sm:$0xff] %v2037
          %2070 = vst [vmem:[#allocation12 + $0x58] sm:$0xff] %v2040
          %2071 = vst [vmem:[#allocation12 + $0x60] sm:$0xff] %v2045
          %2072 = vst [vmem:[#allocation12 + $0x68] sm:$0xff] %v2048
          %2073 = vst [vmem:[#allocation12 + $0x70] sm:$0xff] %v2053
          %2074 = vst [vmem:[#allocation12 + $0x78] sm:$0xff] %v2056
        $region72: #{tpu_custom_call.1} parent=43 // pred_fallthru
          _
        // Predicated region
        $region73: #{tpu_custom_call.1} parent=43 // pred_check
          %p2075 = pneg %p193
        $region74: #{tpu_custom_call.1} parent=43 // pred_check_branch
          %2077 = sbr.rel (%p2075) target = $region76
        $region75: #{tpu_custom_call.1} parent=43 // pred_region
          %s2078 = smul.u32 16, %s30
          %s2080 = ssub.s32 2048, 2048
          %2081 = vsyncadd [#allocation5], %s2080
          %s2082 = smul.addr %s2078, 128
          %s2083 = scalar_lea.hbm %s6, %s2082
          %s2084 = sshll.u32 [#allocation12], 4
          %s2085 = int_to_ptr.vmem [resolvable:$true] %s2084
          %2090 = dma.vmem_to_hbm [thread:$0]  %s2085, 2048, %s2083, [#allocation5], 128, 128, 8
        $region76: #{tpu_custom_call.1} parent=43 // pred_fallthru
          _
        // Predicated region
        $region77: #{tpu_custom_call.1} parent=43 // pred_check
          %p2091 = pneg %p193
        $region78: #{tpu_custom_call.1} parent=43 // pred_check_branch
          %2093 = sbr.rel (%p2091) target = $region80
        $region79: #{tpu_custom_call.1} parent=43 // pred_region
          %2094 = dma.done [#allocation5], 2048
        $region80: #{tpu_custom_call.1} parent=43 // pred_fallthru
          _
      $region44: #{tpu_custom_call.1} parent=5 // pred_fallthru
        _
      %p2095 = scmp.le.s32.totalorder 2, %s20
      // Predicated region
      $region81: #{tpu_custom_call.1} parent=5 // pred_check
        %p2096 = pneg %p2095
      $region82: #{tpu_custom_call.1} parent=5 // pred_check_branch
        %2098 = sbr.rel (%p2096) target = $region84
      $region83: #{tpu_custom_call.1} parent=5 // pred_region
        %s2099 = ssub.s32 %s20, 2
      $region84: #{tpu_custom_call.1} parent=5 // pred_fallthru
        _
    $region6: #{tpu_custom_call.1} parent=1 // loop_footer
      %s24 = sadd.s32 1, %s20
    $region7: #{tpu_custom_call.1} parent=1 // loop_footer_branch
      %19 = sbr.rel target = $region3
    $region8: #{tpu_custom_call.1} parent=1 // loop_exit
      _
    %2100 = vsyncpa [#allocation4], 1
    %s2101 = scalar_lea.sflag [#allocation4], 1
    %2102 = vsyncpa %s2101, 1
    %2103 = vsyncpa [#allocation7], 1
    %s2104 = scalar_lea.sflag [#allocation7], 1
    %2105 = vsyncpa %s2104, 1
    %2106 = vsyncpa [#allocation10], 1
    %2107 = vsyncpa [#allocation5], 1
    %s2108 = scalar_lea.sflag [#allocation5], 1
    %2109 = vsyncpa %s2108, 1

</llo_original>
